<compile_context>
chip_gen: v7x
topology: tpu7x:2x2x1
jax: 0.10.0
libtpu: 0.0.40
codegen_flags: <defaults>
</compile_context>

<pallas_src>
import math
from functools import partial

import jax
import jax.numpy as jnp
from jax import lax
from jax.experimental import pallas as pl
from jax.experimental.pallas import tpu as pltpu


def _default_vmem_limit_bytes():
    """~3/4 of the chip's VMEM (96 MiB on v5e/v6e, 48 MiB on v7x)."""
    try:
        cap = pltpu.get_tpu_info().vmem_capacity_bytes
        return int(min(max(cap * 3 // 4, 32 * 1024 * 1024), 100 * 1024 * 1024))
    except Exception:   # non-TPU backends / API drift: conservative fallback
        return 48 * 1024 * 1024


def _pick_head_group(num_heads, head_size, target_lanes):
    """Largest divisor of num_heads with group*head_size <= target_lanes."""
    g = max(1, min(num_heads, target_lanes // max(head_size, 1)))
    while num_heads % g:
        g -= 1
    return g


def _mha_kernel(*refs, n_groups, group, head_size, tq, mm_dtype, resident,
                cache_kv, self_attn):
    """grid = (batch, q_tile, head_group); head_group innermost ("arbitrary")."""
    if self_attn:
        (x_ref, mask_ref, wq_ref, wk_ref, wv_ref, bq_ref, bk_ref, bv_ref,
         wo_ref, bo_ref, out_ref, *scratch) = refs
        xq_ref = xkv_ref = x_ref
    else:
        (xq_ref, xkv_ref, mask_ref, wq_ref, wk_ref, wv_ref, bq_ref, bk_ref,
         bv_ref, wo_ref, bo_ref, out_ref, *scratch) = refs

    t = pl.program_id(1)
    h = pl.program_id(2)
    dh = head_size
    gdh = group * dh

    # Group-h view of each weight/bias slab.  Leading-dim indexing only: no
    # lane-offset slicing of the weight tensors.
    def grp(ref):
        return ref[h] if resident else ref[0]

    wq, wk, wv = grp(wq_ref), grp(wk_ref), grp(wv_ref)     # (H, gdh)  mm_dtype
    bq, bk, bv = grp(bq_ref), grp(bk_ref), grp(bv_ref)     # (1, gdh)  f32
    wo = grp(wo_ref)                                        # (gdh, H)  mm_dtype

    # Query tile.  For self-attention the full (S, H) block is resident and the
    # tile is sliced in-kernel, so x is passed (and DMA'd) only once.
    if self_attn and tq != xq_ref.shape[1]:
        x_q = xq_ref[0, pl.ds(pl.multiple_of(t * tq, tq), tq), :]
    else:
        x_q = xq_ref[0]                                      # (tq, H)

    # Q projection for this head group (1/sqrt(dh) folded into wq/bq on host).
    q = jnp.dot(x_q, wq, preferred_element_type=jnp.float32) + bq
    q = q.astype(mm_dtype)                                   # (tq, gdh)

    # K/V projection for this head group (optionally cached across q tiles).
    def project_kv():
        x_kv = xkv_ref[0]                                    # (S_kv, H)
        k = jnp.dot(x_kv, wk, preferred_element_type=jnp.float32) + bk
        v = jnp.dot(x_kv, wv, preferred_element_type=jnp.float32) + bv
        return k.astype(mm_dtype), v.astype(mm_dtype)

    if cache_kv:
        k_cache, v_cache = scratch

        @pl.when(t == 0)
        def _():
            k0, v0 = project_kv()
            k_cache[h] = k0
            v_cache[h] = v0

        k = k_cache[h]                                       # (S_kv, gdh)
        v = v_cache[h]
    else:
        k, v = project_kv()

    add_mask = mask_ref[0]                                   # (1, S_kv) f32

    # Per-head attention inside the group (static lane slices; f32 softmax).
    ctx_parts = []
    for i in range(group):
        sl = slice(i * dh, (i + 1) * dh)
        qi, ki, vi = q[:, sl], k[:, sl], v[:, sl]
        # q_i @ k_i^T without materializing a transpose (contract last dims).
        s = lax.dot_general(qi, ki, (((1,), (1,)), ((), ())),
                            preferred_element_type=jnp.float32)   # (tq, S_kv)
        s = s + add_mask
        m = jnp.max(s, axis=-1, keepdims=True)
        e = jnp.exp(s - m)
        p = e * pl.reciprocal(jnp.sum(e, axis=-1, keepdims=True), approx=True)
        ctx_parts.append(jnp.dot(p.astype(mm_dtype), vi,
                                 preferred_element_type=jnp.float32))  # (tq,dh)
    ctx = ctx_parts[0] if group == 1 else jnp.concatenate(ctx_parts, axis=-1)

    # Output projection fused across the head group: full-depth K = gdh.
    contrib = jnp.dot(ctx.astype(mm_dtype), wo,
                      preferred_element_type=jnp.float32)    # (tq, H)

    if n_groups == 1:
        out_ref[0] = contrib + bo_ref[...]
    else:
        @pl.when(h == 0)
        def _():
            out_ref[0] = contrib + bo_ref[...]

        @pl.when(h != 0)
        def _():
            out_ref[0] += contrib


def multi_head_attention(hidden_states, key_value_states, attention_mask, params,
                         *, num_heads, block_q=128, matmul_dtype=jnp.bfloat16,
                         head_group_lanes=256, max_resident_weight_bytes=32 << 20,
                         vmem_limit_bytes=None):
    """Pallas-backed multi-head attention forward.

    hidden_states:     (B, S, H) float32 (query side)
    key_value_states:  (B, S_kv, H) float32 or None (self-attention)
    attention_mask:    (B, S_kv)  float32, 1.0 = keep / 0.0 = mask, or None
    params: dict with wq, bq, wk, bk, wv, bv, wo, bo in torch nn.Linear layout
            (weights are (out, in)).
    """
    B, S, H = hidden_states.shape
    if H % num_heads != 0:
        raise ValueError(f"hidden size {H} not divisible by num_heads {num_heads}")
    dh = H // num_heads

    self_attention = key_value_states is None
    if not self_attention and key_value_states.shape[-1] != H:
        raise ValueError("key_value_states hidden size mismatch")

    x = hidden_states.astype(matmul_dtype)
    kv = x if self_attention else key_value_states.astype(matmul_dtype)
    S_kv = kv.shape[1]

    if attention_mask is None:
        attention_mask = jnp.ones((B, S_kv), jnp.float32)
    add_mask = ((1.0 - attention_mask.astype(jnp.float32)) * (-10000.0)
                ).reshape(B, 1, S_kv)

    group = _pick_head_group(num_heads, dh, head_group_lanes)
    n_groups = num_heads // group
    gdh = group * dh
    scale = 1.0 / math.sqrt(dh)

    # --- weights: torch nn.Linear layout (out, in) -> per-group slabs --------
    def grouped_in_out(w, s=1.0):        # (H, H) -> (n_groups, H, gdh)
        return jnp.transpose((w.T * s).reshape(H, n_groups, gdh), (1, 0, 2))

    def grouped_bias(b, s=1.0):          # (H,) -> (n_groups, 1, gdh)
        return (b * s).reshape(n_groups, 1, gdh).astype(jnp.float32)

    w_q = grouped_in_out(params["wq"], scale).astype(matmul_dtype)
    w_k = grouped_in_out(params["wk"]).astype(matmul_dtype)
    w_v = grouped_in_out(params["wv"]).astype(matmul_dtype)
    b_q = grouped_bias(params["bq"], scale)
    b_k = grouped_bias(params["bk"])
    b_v = grouped_bias(params["bv"])
    w_o = params["wo"].T.reshape(n_groups, gdh, H).astype(matmul_dtype)
    b_o = params["bo"].reshape(1, H).astype(jnp.float32)

    # --- query tiling / K-V caching ------------------------------------------
    if S > block_q and S % block_q == 0 and block_q % 8 == 0:
        tq, n_q = block_q, S // block_q
    else:
        tq, n_q = S, 1
    cache_kv = n_q > 1

    itemsize = jnp.dtype(matmul_dtype).itemsize
    weight_bytes = 4 * H * H * itemsize                    # wq + wk + wv + wo
    resident = 2 * weight_bytes <= max_resident_weight_bytes  # x2: double buffer

    if vmem_limit_bytes is None:
        vmem_limit_bytes = _default_vmem_limit_bytes()

    # --- block specs ----------------------------------------------------------
    if resident:
        w_idx = lambda b, t, h: (0, 0, 0)
        wq_block, b_block, wo_block = ((n_groups, H, gdh), (n_groups, 1, gdh),
                                       (n_groups, gdh, H))
    else:
        w_idx = lambda b, t, h: (h, 0, 0)
        wq_block, b_block, wo_block = (1, H, gdh), (1, 1, gdh), (1, gdh, H)

    weight_specs = [
        pl.BlockSpec(wq_block, w_idx),                       # wq
        pl.BlockSpec(wq_block, w_idx),                       # wk
        pl.BlockSpec(wq_block, w_idx),                       # wv
        pl.BlockSpec(b_block, w_idx),                        # bq
        pl.BlockSpec(b_block, w_idx),                        # bk
        pl.BlockSpec(b_block, w_idx),                        # bv
        pl.BlockSpec(wo_block, w_idx),                       # wo
        pl.BlockSpec((1, H), lambda b, t, h: (0, 0)),        # bo
    ]
    mask_spec = pl.BlockSpec((1, 1, S_kv), lambda b, t, h: (b, 0, 0))

    if self_attention:
        in_specs = ([pl.BlockSpec((1, S, H), lambda b, t, h: (b, 0, 0)),
                     mask_spec] + weight_specs)
        args = (x, add_mask, w_q, w_k, w_v, b_q, b_k, b_v, w_o, b_o)
    else:
        in_specs = ([pl.BlockSpec((1, tq, H), lambda b, t, h: (b, t, 0)),
                     pl.BlockSpec((1, S_kv, H), lambda b, t, h: (b, 0, 0)),
                     mask_spec] + weight_specs)
        args = (x, kv, add_mask, w_q, w_k, w_v, b_q, b_k, b_v, w_o, b_o)

    out_spec = pl.BlockSpec((1, tq, H), lambda b, t, h: (b, t, 0))
    scratch = ([pltpu.VMEM((n_groups, S_kv, gdh), matmul_dtype)] * 2
               if cache_kv else [])

    # The q-tile axis must stay sequential when K/V are cached across tiles
    # (tile 0 fills the cache for every head group of a given batch element).
    dims = ("parallel", "arbitrary" if cache_kv else "parallel", "arbitrary")

    kernel = partial(_mha_kernel, n_groups=n_groups, group=group, head_size=dh,
                     tq=tq, mm_dtype=matmul_dtype, resident=resident,
                     cache_kv=cache_kv, self_attn=self_attention)

    return pl.pallas_call(
        kernel,
        out_shape=jax.ShapeDtypeStruct((B, S, H), jnp.float32),
        grid_spec=pltpu.PrefetchScalarGridSpec(
            num_scalar_prefetch=0,
            grid=(B, n_q, n_groups),
            in_specs=in_specs,
            out_specs=out_spec,
            scratch_shapes=scratch),
        compiler_params=pltpu.CompilerParams(
            dimension_semantics=dims,
            vmem_limit_bytes=vmem_limit_bytes),
    )(*args)


def _reference(hidden_states, key_value_states, attention_mask, params,
               *, num_heads, matmul_dtype=jnp.float32):
    """Pure-JAX reference replicating the PyTorch forward (matmuls optionally
    cast to matmul_dtype, mirroring the kernel's precision choices)."""
    x = hidden_states.astype(jnp.float32)
    kv = x if key_value_states is None else key_value_states.astype(jnp.float32)
    B, S, H = x.shape
    dh = H // num_heads
    mm = lambda a: a.astype(matmul_dtype)

    def lin(t, w, b):
        return jnp.einsum("bsh,oh->bso", mm(t), mm(w),
                          preferred_element_type=jnp.float32) + b

    def split(t):
        return t.reshape(B, -1, num_heads, dh).transpose(0, 2, 1, 3)

    q = split(lin(x, params["wq"], params["bq"])) * (1.0 / math.sqrt(dh))
    k = split(lin(kv, params["wk"], params["bk"]))
    v = split(lin(kv, params["wv"], params["bv"]))

    scores = jnp.einsum("bhqd,bhkd->bhqk", mm(q), mm(k),
                        preferred_element_type=jnp.float32)
    if attention_mask is not None:
        m = (1.0 - attention_mask.astype(jnp.float32))[:, None, None, :] * (-10000.0)
        scores = scores + m
    probs = jax.nn.softmax(scores, axis=-1)
    ctx = jnp.einsum("bhqk,bhkd->bhqd", mm(probs), mm(v),
                     preferred_element_type=jnp.float32)
    ctx = ctx.transpose(0, 2, 1, 3).reshape(B, -1, H)
    return jnp.einsum("bsh,oh->bso", mm(ctx), mm(params["wo"]),
                      preferred_element_type=jnp.float32) + params["bo"]


if __name__ == "__main__":
    def make_params(key, hidden):
        ks = jax.random.split(key, 8)
        bound = 1.0 / math.sqrt(hidden)

        def lin(kw, kb):
            w = jax.random.uniform(kw, (hidden, hidden), jnp.float32, -bound, bound)
            b = jax.random.uniform(kb, (hidden,), jnp.float32, -bound, bound)
            return w, b

        wq, bq = lin(ks[0], ks[1])
        wk, bk = lin(ks[2], ks[3])
        wv, bv = lin(ks[4], ks[5])
        wo, bo = lin(ks[6], ks[7])
        return dict(wq=wq, bq=bq, wk=wk, bk=bk, wv=wv, bv=bv, wo=wo, bo=bo)

    root = jax.random.PRNGKey(0)
    k_small, k_big, k_data = jax.random.split(root, 3)
    d1, d2, d3 = jax.random.split(k_data, 3)

    # --- config 1: small shapes (batch=2, seq=8, hidden=32, heads=4) --------
    B, S, H, NH = 2, 8, 32, 4
    params = make_params(k_small, H)
    hidden_states = jax.random.normal(d1, (B, S, H), jnp.float32)
    key_value_states = jax.random.normal(d2, (B, S, H), jnp.float32)
    attention_mask = jnp.stack([
        jnp.concatenate([jnp.ones((6,), jnp.float32), jnp.zeros((2,), jnp.float32)]),
        jnp.ones((S,), jnp.float32),
    ])

    ref_cross = _reference(hidden_states, key_value_states, attention_mask, params,
                           num_heads=NH, matmul_dtype=jnp.bfloat16)
    ref_self = _reference(hidden_states, None, attention_mask, params,
                          num_heads=NH, matmul_dtype=jnp.bfloat16)

    # 1) cross-attention (separate key/value states), single head group.
    out = jax.block_until_ready(
        multi_head_attention(hidden_states, key_value_states, attention_mask,
                             params, num_heads=NH))
    assert out.shape == (B, S, H)
    assert jnp.allclose(out, ref_cross, atol=2e-2, rtol=2e-2), "cross mismatch"

    # 2) self-attention (key_value_states=None): single-input path.
    out_self = jax.block_until_ready(
        multi_head_attention(hidden_states, None, attention_mask, params,
                             num_heads=NH))
    assert jnp.allclose(out_self, ref_self, atol=2e-2, rtol=2e-2), "self mismatch"

    # 3) larger self-attention exercising query tiling + the K/V VMEM cache.
    B2, S2, H2, NH2 = 1, 256, 128, 2
    params2 = make_params(k_big, H2)
    hidden2 = jax.random.normal(d3, (B2, S2, H2), jnp.float32)
    mask2 = jnp.concatenate([jnp.ones((B2, 200), jnp.float32),
                             jnp.zeros((B2, S2 - 200), jnp.float32)], axis=1)
    ref2 = _reference(hidden2, None, mask2, params2, num_heads=NH2,
                      matmul_dtype=jnp.bfloat16)
    out2 = jax.block_until_ready(
        multi_head_attention(hidden2, None, mask2, params2, num_heads=NH2,
                             block_q=128))
    assert jnp.allclose(out2, ref2, atol=2e-2, rtol=2e-2), "tiled path mismatch"

    # 4) same config but force per-group-tiled (non-resident) weight slabs.
    out2t = jax.block_until_ready(
        multi_head_attention(hidden2, None, mask2, params2, num_heads=NH2,
                             block_q=128, max_resident_weight_bytes=0))
    assert jnp.allclose(out2t, ref2, atol=2e-2, rtol=2e-2), "tiled weights mismatch"

    # 5) force multiple head groups (accumulation over the group axis), both
    #    with resident and with per-group-tiled weights.
    for mrb in (32 << 20, 0):
        out_g = jax.block_until_ready(
            multi_head_attention(hidden_states, key_value_states, attention_mask,
                                 params, num_heads=NH, head_group_lanes=16,
                                 max_resident_weight_bytes=mrb))
        assert jnp.allclose(out_g, ref_cross, atol=2e-2, rtol=2e-2), \
            "multi-group mismatch"

    print("KERNEL_OK")
</pallas_src>

<mosaic_0001>
module attributes {stable_mosaic.version = 11 : i64} {
  func.func @_mha_kernel(%arg0: i32, %arg1: i32, %arg2: i32, %arg3: memref<1x8x32xbf16, #tpu.memory_space<vmem>>, %arg4: memref<1x8x32xbf16, #tpu.memory_space<vmem>>, %arg5: memref<1x1x8xf32, #tpu.memory_space<vmem>>, %arg6: memref<1x32x32xbf16, #tpu.memory_space<vmem>>, %arg7: memref<1x32x32xbf16, #tpu.memory_space<vmem>>, %arg8: memref<1x32x32xbf16, #tpu.memory_space<vmem>>, %arg9: memref<1x1x32xf32, #tpu.memory_space<vmem>>, %arg10: memref<1x1x32xf32, #tpu.memory_space<vmem>>, %arg11: memref<1x1x32xf32, #tpu.memory_space<vmem>>, %arg12: memref<1x32x32xbf16, #tpu.memory_space<vmem>>, %arg13: memref<1x32xf32, #tpu.memory_space<vmem>>, %arg14: memref<1x8x32xf32, #tpu.memory_space<vmem>>) attributes {dimension_semantics = [#tpu.dimension_semantics<parallel>, #tpu.dimension_semantics<parallel>, #tpu.dimension_semantics<arbitrary>], iteration_bounds = array<i64: 2, 1, 1>, scalar_prefetch = 0 : i64, scratch_operands = 0 : i64, tpu.core_type = #tpu.core_type<tc>, window_params = [{transform_indices = @transform_0, window_bounds = array<i64: 1, 8, 32>}, {transform_indices = @transform_1, window_bounds = array<i64: 1, 8, 32>}, {transform_indices = @transform_2, window_bounds = array<i64: 1, 1, 8>}, {pipeline_mode = #tpu.pipeline_mode<synchronous>, transform_indices = @transform_3, window_bounds = array<i64: 1, 32, 32>}, {pipeline_mode = #tpu.pipeline_mode<synchronous>, transform_indices = @transform_4, window_bounds = array<i64: 1, 32, 32>}, {pipeline_mode = #tpu.pipeline_mode<synchronous>, transform_indices = @transform_5, window_bounds = array<i64: 1, 32, 32>}, {pipeline_mode = #tpu.pipeline_mode<synchronous>, transform_indices = @transform_6, window_bounds = array<i64: 1, 1, 32>}, {pipeline_mode = #tpu.pipeline_mode<synchronous>, transform_indices = @transform_7, window_bounds = array<i64: 1, 1, 32>}, {pipeline_mode = #tpu.pipeline_mode<synchronous>, transform_indices = @transform_8, window_bounds = array<i64: 1, 1, 32>}, {pipeline_mode = #tpu.pipeline_mode<synchronous>, transform_indices = @transform_9, window_bounds = array<i64: 1, 32, 32>}, {pipeline_mode = #tpu.pipeline_mode<synchronous>, transform_indices = @transform_10, window_bounds = array<i64: 1, 32>}, {transform_indices = @transform_11, window_bounds = array<i64: 1, 8, 32>}]} {
    %0 = arith.index_cast %arg2 : i32 to index
    %c0 = arith.constant 0 : index
    %c0_0 = arith.constant 0 : index
    %1 = vector.load %arg6[%0, %c0, %c0_0] : memref<1x32x32xbf16, #tpu.memory_space<vmem>>, vector<1x32x32xbf16>
    %2 = vector.shape_cast %1 : vector<1x32x32xbf16> to vector<32x32xbf16>
    %3 = arith.index_cast %arg2 : i32 to index
    %c0_1 = arith.constant 0 : index
    %c0_2 = arith.constant 0 : index
    %4 = vector.load %arg7[%3, %c0_1, %c0_2] : memref<1x32x32xbf16, #tpu.memory_space<vmem>>, vector<1x32x32xbf16>
    %5 = vector.shape_cast %4 : vector<1x32x32xbf16> to vector<32x32xbf16>
    %6 = arith.index_cast %arg2 : i32 to index
    %c0_3 = arith.constant 0 : index
    %c0_4 = arith.constant 0 : index
    %7 = vector.load %arg8[%6, %c0_3, %c0_4] : memref<1x32x32xbf16, #tpu.memory_space<vmem>>, vector<1x32x32xbf16>
    %8 = vector.shape_cast %7 : vector<1x32x32xbf16> to vector<32x32xbf16>
    %9 = arith.index_cast %arg2 : i32 to index
    %c0_5 = arith.constant 0 : index
    %c0_6 = arith.constant 0 : index
    %10 = vector.load %arg9[%9, %c0_5, %c0_6] : memref<1x1x32xf32, #tpu.memory_space<vmem>>, vector<1x1x32xf32>
    %11 = vector.shape_cast %10 : vector<1x1x32xf32> to vector<1x32xf32>
    %12 = arith.index_cast %arg2 : i32 to index
    %c0_7 = arith.constant 0 : index
    %c0_8 = arith.constant 0 : index
    %13 = vector.load %arg10[%12, %c0_7, %c0_8] : memref<1x1x32xf32, #tpu.memory_space<vmem>>, vector<1x1x32xf32>
    %14 = vector.shape_cast %13 : vector<1x1x32xf32> to vector<1x32xf32>
    %15 = arith.index_cast %arg2 : i32 to index
    %c0_9 = arith.constant 0 : index
    %c0_10 = arith.constant 0 : index
    %16 = vector.load %arg11[%15, %c0_9, %c0_10] : memref<1x1x32xf32, #tpu.memory_space<vmem>>, vector<1x1x32xf32>
    %17 = vector.shape_cast %16 : vector<1x1x32xf32> to vector<1x32xf32>
    %18 = arith.index_cast %arg2 : i32 to index
    %c0_11 = arith.constant 0 : index
    %c0_12 = arith.constant 0 : index
    %19 = vector.load %arg12[%18, %c0_11, %c0_12] : memref<1x32x32xbf16, #tpu.memory_space<vmem>>, vector<1x32x32xbf16>
    %20 = vector.shape_cast %19 : vector<1x32x32xbf16> to vector<32x32xbf16>
    %c0_13 = arith.constant 0 : index
    %c0_14 = arith.constant 0 : index
    %c0_15 = arith.constant 0 : index
    %21 = vector.load %arg3[%c0_13, %c0_14, %c0_15] : memref<1x8x32xbf16, #tpu.memory_space<vmem>>, vector<1x8x32xbf16>
    %22 = vector.shape_cast %21 : vector<1x8x32xbf16> to vector<8x32xbf16>
    %cst = arith.constant dense<0.000000e+00> : vector<8x32xf32>
    %23 = tpu.matmul %22, %2, %cst {dimension_numbers = #tpu.dot_dimension_numbers<[1], [0], [0], [1], [0, 0, 1, 1], [], []>} : vector<8x32xbf16>, vector<32x32xbf16>, vector<8x32xf32> -> vector<8x32xf32>
    %24 = vector.broadcast %11 : vector<1x32xf32> to vector<8x32xf32>
    %25 = arith.addf %23, %24 : vector<8x32xf32>
    %26 = arith.truncf %25 : vector<8x32xf32> to vector<8x32xbf16>
    %c0_16 = arith.constant 0 : index
    %c0_17 = arith.constant 0 : index
    %c0_18 = arith.constant 0 : index
    %27 = vector.load %arg4[%c0_16, %c0_17, %c0_18] : memref<1x8x32xbf16, #tpu.memory_space<vmem>>, vector<1x8x32xbf16>
    %28 = vector.shape_cast %27 : vector<1x8x32xbf16> to vector<8x32xbf16>
    %cst_19 = arith.constant dense<0.000000e+00> : vector<8x32xf32>
    %29 = tpu.matmul %28, %5, %cst_19 {dimension_numbers = #tpu.dot_dimension_numbers<[1], [0], [0], [1], [0, 0, 1, 1], [], []>} : vector<8x32xbf16>, vector<32x32xbf16>, vector<8x32xf32> -> vector<8x32xf32>
    %30 = vector.broadcast %14 : vector<1x32xf32> to vector<8x32xf32>
    %31 = arith.addf %29, %30 : vector<8x32xf32>
    %cst_20 = arith.constant dense<0.000000e+00> : vector<8x32xf32>
    %32 = tpu.matmul %28, %8, %cst_20 {dimension_numbers = #tpu.dot_dimension_numbers<[1], [0], [0], [1], [0, 0, 1, 1], [], []>} : vector<8x32xbf16>, vector<32x32xbf16>, vector<8x32xf32> -> vector<8x32xf32>
    %33 = vector.broadcast %17 : vector<1x32xf32> to vector<8x32xf32>
    %34 = arith.addf %32, %33 : vector<8x32xf32>
    %35 = arith.truncf %31 : vector<8x32xf32> to vector<8x32xbf16>
    %36 = arith.truncf %34 : vector<8x32xf32> to vector<8x32xbf16>
    %c0_21 = arith.constant 0 : index
    %c0_22 = arith.constant 0 : index
    %c0_23 = arith.constant 0 : index
    %37 = vector.load %arg5[%c0_21, %c0_22, %c0_23] : memref<1x1x8xf32, #tpu.memory_space<vmem>>, vector<1x1x8xf32>
    %38 = vector.shape_cast %37 : vector<1x1x8xf32> to vector<1x8xf32>
    %39 = vector.extract_strided_slice %26 {offsets = [0, 0], sizes = [8, 8], strides = [1, 1]} : vector<8x32xbf16> to vector<8x8xbf16>
    %40 = vector.extract_strided_slice %35 {offsets = [0, 0], sizes = [8, 8], strides = [1, 1]} : vector<8x32xbf16> to vector<8x8xbf16>
    %41 = vector.extract_strided_slice %36 {offsets = [0, 0], sizes = [8, 8], strides = [1, 1]} : vector<8x32xbf16> to vector<8x8xbf16>
    %cst_24 = arith.constant dense<0.000000e+00> : vector<8x8xf32>
    %42 = tpu.matmul %39, %40, %cst_24 {dimension_numbers = #tpu.dot_dimension_numbers<[1], [1], [0], [0], [0, 0, 1, 0], [], []>} : vector<8x8xbf16>, vector<8x8xbf16>, vector<8x8xf32> -> vector<8x8xf32>
    %43 = vector.broadcast %38 : vector<1x8xf32> to vector<8x8xf32>
    %44 = arith.addf %42, %43 : vector<8x8xf32>
    %cst_25 = arith.constant dense<0xFF800000> : vector<8xf32>
    %45 = vector.multi_reduction <maximumf>, %44, %cst_25 [1] : vector<8x8xf32> to vector<8xf32>
    %46 = vector.shape_cast %45 : vector<8xf32> to vector<8x1xf32>
    %47 = vector.broadcast %46 : vector<8x1xf32> to vector<8x8xf32>
    %48 = arith.subf %44, %47 : vector<8x8xf32>
    %49 = math.exp %48 : vector<8x8xf32>
    %cst_26 = arith.constant dense<0.000000e+00> : vector<8xf32>
    %50 = vector.multi_reduction <add>, %49, %cst_26 [1] : vector<8x8xf32> to vector<8xf32>
    %51 = vector.shape_cast %50 : vector<8xf32> to vector<8x1xf32>
    %52 = tpu.reciprocal %51 {approx = true} : vector<8x1xf32> -> vector<8x1xf32>
    %53 = vector.broadcast %52 : vector<8x1xf32> to vector<8x8xf32>
    %54 = arith.mulf %49, %53 : vector<8x8xf32>
    %55 = arith.truncf %54 : vector<8x8xf32> to vector<8x8xbf16>
    %cst_27 = arith.constant dense<0.000000e+00> : vector<8x8xf32>
    %56 = tpu.matmul %55, %41, %cst_27 {dimension_numbers = #tpu.dot_dimension_numbers<[1], [0], [0], [1], [0, 0, 1, 1], [], []>} : vector<8x8xbf16>, vector<8x8xbf16>, vector<8x8xf32> -> vector<8x8xf32>
    %57 = vector.extract_strided_slice %26 {offsets = [0, 8], sizes = [8, 8], strides = [1, 1]} : vector<8x32xbf16> to vector<8x8xbf16>
    %58 = vector.extract_strided_slice %35 {offsets = [0, 8], sizes = [8, 8], strides = [1, 1]} : vector<8x32xbf16> to vector<8x8xbf16>
    %59 = vector.extract_strided_slice %36 {offsets = [0, 8], sizes = [8, 8], strides = [1, 1]} : vector<8x32xbf16> to vector<8x8xbf16>
    %cst_28 = arith.constant dense<0.000000e+00> : vector<8x8xf32>
    %60 = tpu.matmul %57, %58, %cst_28 {dimension_numbers = #tpu.dot_dimension_numbers<[1], [1], [0], [0], [0, 0, 1, 0], [], []>} : vector<8x8xbf16>, vector<8x8xbf16>, vector<8x8xf32> -> vector<8x8xf32>
    %61 = vector.broadcast %38 : vector<1x8xf32> to vector<8x8xf32>
    %62 = arith.addf %60, %61 : vector<8x8xf32>
    %cst_29 = arith.constant dense<0xFF800000> : vector<8xf32>
    %63 = vector.multi_reduction <maximumf>, %62, %cst_29 [1] : vector<8x8xf32> to vector<8xf32>
    %64 = vector.shape_cast %63 : vector<8xf32> to vector<8x1xf32>
    %65 = vector.broadcast %64 : vector<8x1xf32> to vector<8x8xf32>
    %66 = arith.subf %62, %65 : vector<8x8xf32>
    %67 = math.exp %66 : vector<8x8xf32>
    %cst_30 = arith.constant dense<0.000000e+00> : vector<8xf32>
    %68 = vector.multi_reduction <add>, %67, %cst_30 [1] : vector<8x8xf32> to vector<8xf32>
    %69 = vector.shape_cast %68 : vector<8xf32> to vector<8x1xf32>
    %70 = tpu.reciprocal %69 {approx = true} : vector<8x1xf32> -> vector<8x1xf32>
    %71 = vector.broadcast %70 : vector<8x1xf32> to vector<8x8xf32>
    %72 = arith.mulf %67, %71 : vector<8x8xf32>
    %73 = arith.truncf %72 : vector<8x8xf32> to vector<8x8xbf16>
    %cst_31 = arith.constant dense<0.000000e+00> : vector<8x8xf32>
    %74 = tpu.matmul %73, %59, %cst_31 {dimension_numbers = #tpu.dot_dimension_numbers<[1], [0], [0], [1], [0, 0, 1, 1], [], []>} : vector<8x8xbf16>, vector<8x8xbf16>, vector<8x8xf32> -> vector<8x8xf32>
    %75 = vector.extract_strided_slice %26 {offsets = [0, 16], sizes = [8, 8], strides = [1, 1]} : vector<8x32xbf16> to vector<8x8xbf16>
    %76 = vector.extract_strided_slice %35 {offsets = [0, 16], sizes = [8, 8], strides = [1, 1]} : vector<8x32xbf16> to vector<8x8xbf16>
    %77 = vector.extract_strided_slice %36 {offsets = [0, 16], sizes = [8, 8], strides = [1, 1]} : vector<8x32xbf16> to vector<8x8xbf16>
    %cst_32 = arith.constant dense<0.000000e+00> : vector<8x8xf32>
    %78 = tpu.matmul %75, %76, %cst_32 {dimension_numbers = #tpu.dot_dimension_numbers<[1], [1], [0], [0], [0, 0, 1, 0], [], []>} : vector<8x8xbf16>, vector<8x8xbf16>, vector<8x8xf32> -> vector<8x8xf32>
    %79 = vector.broadcast %38 : vector<1x8xf32> to vector<8x8xf32>
    %80 = arith.addf %78, %79 : vector<8x8xf32>
    %cst_33 = arith.constant dense<0xFF800000> : vector<8xf32>
    %81 = vector.multi_reduction <maximumf>, %80, %cst_33 [1] : vector<8x8xf32> to vector<8xf32>
    %82 = vector.shape_cast %81 : vector<8xf32> to vector<8x1xf32>
    %83 = vector.broadcast %82 : vector<8x1xf32> to vector<8x8xf32>
    %84 = arith.subf %80, %83 : vector<8x8xf32>
    %85 = math.exp %84 : vector<8x8xf32>
    %cst_34 = arith.constant dense<0.000000e+00> : vector<8xf32>
    %86 = vector.multi_reduction <add>, %85, %cst_34 [1] : vector<8x8xf32> to vector<8xf32>
    %87 = vector.shape_cast %86 : vector<8xf32> to vector<8x1xf32>
    %88 = tpu.reciprocal %87 {approx = true} : vector<8x1xf32> -> vector<8x1xf32>
    %89 = vector.broadcast %88 : vector<8x1xf32> to vector<8x8xf32>
    %90 = arith.mulf %85, %89 : vector<8x8xf32>
    %91 = arith.truncf %90 : vector<8x8xf32> to vector<8x8xbf16>
    %cst_35 = arith.constant dense<0.000000e+00> : vector<8x8xf32>
    %92 = tpu.matmul %91, %77, %cst_35 {dimension_numbers = #tpu.dot_dimension_numbers<[1], [0], [0], [1], [0, 0, 1, 1], [], []>} : vector<8x8xbf16>, vector<8x8xbf16>, vector<8x8xf32> -> vector<8x8xf32>
    %93 = vector.extract_strided_slice %26 {offsets = [0, 24], sizes = [8, 8], strides = [1, 1]} : vector<8x32xbf16> to vector<8x8xbf16>
    %94 = vector.extract_strided_slice %35 {offsets = [0, 24], sizes = [8, 8], strides = [1, 1]} : vector<8x32xbf16> to vector<8x8xbf16>
    %95 = vector.extract_strided_slice %36 {offsets = [0, 24], sizes = [8, 8], strides = [1, 1]} : vector<8x32xbf16> to vector<8x8xbf16>
    %cst_36 = arith.constant dense<0.000000e+00> : vector<8x8xf32>
    %96 = tpu.matmul %93, %94, %cst_36 {dimension_numbers = #tpu.dot_dimension_numbers<[1], [1], [0], [0], [0, 0, 1, 0], [], []>} : vector<8x8xbf16>, vector<8x8xbf16>, vector<8x8xf32> -> vector<8x8xf32>
    %97 = vector.broadcast %38 : vector<1x8xf32> to vector<8x8xf32>
    %98 = arith.addf %96, %97 : vector<8x8xf32>
    %cst_37 = arith.constant dense<0xFF800000> : vector<8xf32>
    %99 = vector.multi_reduction <maximumf>, %98, %cst_37 [1] : vector<8x8xf32> to vector<8xf32>
    %100 = vector.shape_cast %99 : vector<8xf32> to vector<8x1xf32>
    %101 = vector.broadcast %100 : vector<8x1xf32> to vector<8x8xf32>
    %102 = arith.subf %98, %101 : vector<8x8xf32>
    %103 = math.exp %102 : vector<8x8xf32>
    %cst_38 = arith.constant dense<0.000000e+00> : vector<8xf32>
    %104 = vector.multi_reduction <add>, %103, %cst_38 [1] : vector<8x8xf32> to vector<8xf32>
    %105 = vector.shape_cast %104 : vector<8xf32> to vector<8x1xf32>
    %106 = tpu.reciprocal %105 {approx = true} : vector<8x1xf32> -> vector<8x1xf32>
    %107 = vector.broadcast %106 : vector<8x1xf32> to vector<8x8xf32>
    %108 = arith.mulf %103, %107 : vector<8x8xf32>
    %109 = arith.truncf %108 : vector<8x8xf32> to vector<8x8xbf16>
    %cst_39 = arith.constant dense<0.000000e+00> : vector<8x8xf32>
    %110 = tpu.matmul %109, %95, %cst_39 {dimension_numbers = #tpu.dot_dimension_numbers<[1], [0], [0], [1], [0, 0, 1, 1], [], []>} : vector<8x8xbf16>, vector<8x8xbf16>, vector<8x8xf32> -> vector<8x8xf32>
    %111 = tpu.concatenate %56, %74, %92, %110 in 1 : vector<8x8xf32>, vector<8x8xf32>, vector<8x8xf32>, vector<8x8xf32> -> vector<8x32xf32>
    %112 = arith.truncf %111 : vector<8x32xf32> to vector<8x32xbf16>
    %cst_40 = arith.constant dense<0.000000e+00> : vector<8x32xf32>
    %113 = tpu.matmul %112, %20, %cst_40 {dimension_numbers = #tpu.dot_dimension_numbers<[1], [0], [0], [1], [0, 0, 1, 1], [], []>} : vector<8x32xbf16>, vector<32x32xbf16>, vector<8x32xf32> -> vector<8x32xf32>
    %c0_41 = arith.constant 0 : index
    %c0_42 = arith.constant 0 : index
    %114 = vector.load %arg13[%c0_41, %c0_42] : memref<1x32xf32, #tpu.memory_space<vmem>>, vector<1x32xf32>
    %115 = vector.broadcast %114 : vector<1x32xf32> to vector<8x32xf32>
    %116 = arith.addf %113, %115 : vector<8x32xf32>
    %c0_43 = arith.constant 0 : index
    %c0_44 = arith.constant 0 : index
    %c0_45 = arith.constant 0 : index
    %117 = vector.load %arg14[%c0_43, %c0_44, %c0_45] : memref<1x8x32xf32, #tpu.memory_space<vmem>>, vector<1x8x32xf32>
    %118 = vector.shape_cast %117 : vector<1x8x32xf32> to vector<8x32xf32>
    %119 = vector.shape_cast %116 : vector<8x32xf32> to vector<1x8x32xf32>
    tpu.vector_store %arg14[%c0_43, %c0_44, %c0_45], %119 {strides = array<i32>} : memref<1x8x32xf32, #tpu.memory_space<vmem>>, vector<1x8x32xf32>,
    return
  }
  func.func @transform_0(%arg0: i32, %arg1: i32, %arg2: i32) -> (i32, i32, i32) {
    %c0_i32 = arith.constant 0 : i32
    %c0_i32_0 = arith.constant 0 : i32
    return %arg0, %arg1, %c0_i32 : i32, i32, i32
  }
  func.func @transform_1(%arg0: i32, %arg1: i32, %arg2: i32) -> (i32, i32, i32) {
    %c0_i32 = arith.constant 0 : i32
    %c0_i32_0 = arith.constant 0 : i32
    %c0_i32_1 = arith.constant 0 : i32
    return %arg0, %c0_i32, %c0_i32_0 : i32, i32, i32
  }
  func.func @transform_2(%arg0: i32, %arg1: i32, %arg2: i32) -> (i32, i32, i32) {
    %c0_i32 = arith.constant 0 : i32
    %c0_i32_0 = arith.constant 0 : i32
    %c0_i32_1 = arith.constant 0 : i32
    return %arg0, %c0_i32, %c0_i32_0 : i32, i32, i32
  }
  func.func @transform_3(%arg0: i32, %arg1: i32, %arg2: i32) -> (i32, i32, i32) {
    %c0_i32 = arith.constant 0 : i32
    %c0_i32_0 = arith.constant 0 : i32
    %c0_i32_1 = arith.constant 0 : i32
    %c0_i32_2 = arith.constant 0 : i32
    return %c0_i32, %c0_i32_0, %c0_i32_1 : i32, i32, i32
  }
  func.func @transform_4(%arg0: i32, %arg1: i32, %arg2: i32) -> (i32, i32, i32) {
    %c0_i32 = arith.constant 0 : i32
    %c0_i32_0 = arith.constant 0 : i32
    %c0_i32_1 = arith.constant 0 : i32
    %c0_i32_2 = arith.constant 0 : i32
    return %c0_i32, %c0_i32_0, %c0_i32_1 : i32, i32, i32
  }
  func.func @transform_5(%arg0: i32, %arg1: i32, %arg2: i32) -> (i32, i32, i32) {
    %c0_i32 = arith.constant 0 : i32
    %c0_i32_0 = arith.constant 0 : i32
    %c0_i32_1 = arith.constant 0 : i32
    %c0_i32_2 = arith.constant 0 : i32
    return %c0_i32, %c0_i32_0, %c0_i32_1 : i32, i32, i32
  }
  func.func @transform_6(%arg0: i32, %arg1: i32, %arg2: i32) -> (i32, i32, i32) {
    %c0_i32 = arith.constant 0 : i32
    %c0_i32_0 = arith.constant 0 : i32
    %c0_i32_1 = arith.constant 0 : i32
    %c0_i32_2 = arith.constant 0 : i32
    return %c0_i32, %c0_i32_0, %c0_i32_1 : i32, i32, i32
  }
  func.func @transform_7(%arg0: i32, %arg1: i32, %arg2: i32) -> (i32, i32, i32) {
    %c0_i32 = arith.constant 0 : i32
    %c0_i32_0 = arith.constant 0 : i32
    %c0_i32_1 = arith.constant 0 : i32
    %c0_i32_2 = arith.constant 0 : i32
    return %c0_i32, %c0_i32_0, %c0_i32_1 : i32, i32, i32
  }
  func.func @transform_8(%arg0: i32, %arg1: i32, %arg2: i32) -> (i32, i32, i32) {
    %c0_i32 = arith.constant 0 : i32
    %c0_i32_0 = arith.constant 0 : i32
    %c0_i32_1 = arith.constant 0 : i32
    %c0_i32_2 = arith.constant 0 : i32
    return %c0_i32, %c0_i32_0, %c0_i32_1 : i32, i32, i32
  }
  func.func @transform_9(%arg0: i32, %arg1: i32, %arg2: i32) -> (i32, i32, i32) {
    %c0_i32 = arith.constant 0 : i32
    %c0_i32_0 = arith.constant 0 : i32
    %c0_i32_1 = arith.constant 0 : i32
    %c0_i32_2 = arith.constant 0 : i32
    return %c0_i32, %c0_i32_0, %c0_i32_1 : i32, i32, i32
  }
  func.func @transform_10(%arg0: i32, %arg1: i32, %arg2: i32) -> (i32, i32) {
    %c0_i32 = arith.constant 0 : i32
    %c0_i32_0 = arith.constant 0 : i32
    %c0_i32_1 = arith.constant 0 : i32
    return %c0_i32, %c0_i32_0 : i32, i32
  }
  func.func @transform_11(%arg0: i32, %arg1: i32, %arg2: i32) -> (i32, i32, i32) {
    %c0_i32 = arith.constant 0 : i32
    %c0_i32_0 = arith.constant 0 : i32
    return %arg0, %arg1, %c0_i32 : i32, i32, i32
  }
}

</mosaic_0001>

<llo_original>
// kernel: tpu_custom_call.1
$region0: #{tpu_custom_call.1}
  #allocation0 [shape = 'u32[]', space=smem, size = 0x4, offset = 0x4, fixed_abs, tag = 'smem constant byte address 0x4 - core index']
  #allocation1 [shape = 'u32[144,128]{1,0:T(1,128)}', space=vmem, size = 0x12000, scoped, tag = 'internal scratch']
  %s0 = inlined_call_operand.hbm [shape: bf16[2,8,32], index: 0, kind: input, shape index: {}]
  %s1 = inlined_call_operand.hbm [shape: bf16[2,8,32], index: 1, kind: input, shape index: {}]
  %s2 = inlined_call_operand.vmem [shape: f32[2,1,8], index: 2, kind: input, shape index: {}]
  %s3 = inlined_call_operand.hbm [shape: bf16[1,32,32], index: 3, kind: input, shape index: {}]
  %s4 = inlined_call_operand.hbm [shape: bf16[1,32,32], index: 4, kind: input, shape index: {}]
  %s5 = inlined_call_operand.vmem [shape: bf16[1,32,32], index: 5, kind: input, shape index: {}]
  %s6 = inlined_call_operand.hbm [shape: f32[1,1,32], index: 6, kind: input, shape index: {}]
  %s7 = inlined_call_operand.hbm [shape: f32[1,1,32], index: 7, kind: input, shape index: {}]
  %s8 = inlined_call_operand.hbm [shape: f32[1,1,32], index: 8, kind: input, shape index: {}]
  %s9 = inlined_call_operand.vmem [shape: bf16[1,32,32], index: 9, kind: input, shape index: {}]
  %s10 = inlined_call_operand.vmem [shape: f32[1,32], index: 10, kind: input, shape index: {}]
  %s11 = inlined_call_operand.hbm [shape: f32[2,8,32], index: 11, kind: output, shape index: {}]
  %s12 = sld [smem:[#allocation0]]
  $region105: #{tpu_custom_call.1} parent=0
    _
  %s14 = ssub.s32 1, %s12
  %s15 = scalar_select 0, %s14, %s12
  $region1: #{tpu_custom_call.1} parent=0
    #allocation2 [shape = 'u8[4096]{0}', space=vmem, size = 0x1000, scoped, tag = 'input window, operand 0']
    #allocation3 [shape = 's32[2]{0}', space=sflag, size = 0x8, scoped, tag = 'scoped memory for tpu_custom_call.1']
    #allocation4 [shape = 's32[2]{0}', space=sflag, size = 0x8, scoped, tag = 'scoped memory for tpu_custom_call.1']
    #allocation5 [shape = 'u8[4096]{0}', space=vmem, size = 0x1000, scoped, tag = 'input window, operand 1']
    #allocation6 [shape = 's32[2]{0}', space=sflag, size = 0x8, scoped, tag = 'scoped memory for tpu_custom_call.1']
    #allocation7 [shape = 'u8[8192]{0}', space=vmem, size = 0x2000, scoped, tag = 'input window, operand 3, single buffered']
    #allocation8 [shape = 'u8[8192]{0}', space=vmem, size = 0x2000, scoped, tag = 'input window, operand 4, single buffered']
    #allocation9 [shape = 's32[1]{0}', space=sflag, size = 0x4, scoped, tag = 'scoped memory for tpu_custom_call.1']
    #allocation10 [shape = 'u8[512]{0}', space=vmem, size = 0x400, scoped, tag = 'input window, operand 6, single buffered']
    #allocation11 [shape = 'u8[512]{0}', space=vmem, size = 0x400, scoped, tag = 'input window, operand 7, single buffered']
    #allocation12 [shape = 's32[1]{0}', space=sflag, size = 0x4, scoped, tag = 'scoped memory for tpu_custom_call.1']
    #allocation13 [shape = 'u8[512]{0}', space=vmem, size = 0x400, scoped, tag = 'input window, operand 8, single buffered']
    #allocation14 [shape = 'u8[8192]{0}', space=vmem, size = 0x2000, scoped, tag = 'output window, operand 0']
    %16 = vsyncpa [#allocation3], 0
    %s17 = scalar_lea.sflag [#allocation3], 1
    %18 = vsyncpa %s17, 0
    %19 = vsyncpa [#allocation6], 0
    %s20 = scalar_lea.sflag [#allocation6], 1
    %21 = vsyncpa %s20, 0
    %22 = vsyncpa [#allocation9], 0
    %23 = vsyncpa [#allocation12], 0
    %24 = vsyncpa [#allocation4], 0
    %s25 = scalar_lea.sflag [#allocation4], 1
    %26 = vsyncpa %s25, 0
    loop: start=0, step=1, limit=4
    $region2: #{tpu_custom_call.1} parent=1 // loop_pre_header
      _
    $region3: #{tpu_custom_call.1} parent=1 // loop_header
      %s28 = sphi 0, %s32
      %p29 = scmp.ge.s32.totalorder %s28, 4
      %s35 = sphi 0, %s54
      %s36 = sphi 0, %s50
      %s37 = sphi 0, %s46
      %s38 = sphi 0, %s35
      %s39 = sphi 0, %s36
      %s40 = sphi 0, %s37
      %s41 = sphi 0, %s38
      %s42 = sphi 0, %s39
      %s43 = sphi 0, %s40
      %s59 = sphi 0, %s61
      %s62 = sphi 0, %s59
      %s63 = sphi 0, %s62
      %s79 = sphi 0, %s63
      %s85 = sphi 0, %s87
      %s88 = sphi 0, %s85
      %s89 = sphi 0, %s88
      %s105 = sphi 0, %s89
      %s111 = sphi 0, %s113
      %s114 = sphi 0, %s111
      %s115 = sphi 0, %s114
      %s131 = sphi 0, %s115
      %s135 = sphi 0, %s135
      %s137 = sphi 0, %s135
      %s138 = sphi 0, %s137
      %s152 = sphi 0, %s138
      %s156 = sphi 0, %s156
      %s158 = sphi 0, %s156
      %s159 = sphi 0, %s158
      %s173 = sphi 0, %s159
      %s177 = sphi 0, %s177
      %s179 = sphi 0, %s177
      %s180 = sphi 0, %s179
      %s194 = sphi 0, %s180
      %s198 = sphi 0, %s198
      %s200 = sphi 0, %s198
      %s201 = sphi 0, %s200
      %s215 = sphi 0, %s201
      %s219 = sphi 0, %s219
      %s221 = sphi 0, %s219
      %s222 = sphi 0, %s221
      %s236 = sphi 0, %s222
      %s240 = sphi 0, %s240
      %s242 = sphi 0, %s240
      %s243 = sphi 0, %s242
      %s257 = sphi 0, %s243
      %s261 = sphi 0, %s261
      %s263 = sphi 0, %s261
      %s264 = sphi 0, %s263
      %s278 = sphi 0, %s264
      %s282 = sphi 0, %s282
      %s284 = sphi 0, %s282
      %s285 = sphi 0, %s284
      %s299 = sphi 0, %s285
      %s307 = sphi 0, %s309
      %s310 = sphi 0, %s307
      %s311 = sphi 0, %s310
      %s327 = sphi 0, %s311
    $region4: #{tpu_custom_call.1} parent=1 // loop_header_branch
      %31 = sbr.rel (%p29) target = $region8
    $region5: #{tpu_custom_call.1} parent=1 // loop_body
      %s33 = ssub.s32 %s28, 1
      %s34 = ssub.s32 %s28, 2
      %s44 = sadd.s32 1, %s37
      %p45 = scmp.ge.s32.totalorder %s44, 1
      %s46 = scalar_select %p45, 0, %s44
      %s47 = sadd.s32 1, %s36
      %s48 = scalar_select %p45, %s47, %s36
      %p49 = scmp.ge.s32.totalorder %s48, 1
      %s50 = scalar_select %p49, 0, %s48
      %s51 = sadd.s32 1, %s35
      %s52 = scalar_select %p49, %s51, %s35
      %p53 = scmp.ge.s32.totalorder %s52, 2
      %s54 = scalar_select %p53, 0, %s52
      %s55 = ssub.s32 %s35, %s54
      %s56 = ssub.s32 %s36, %s50
      %s57 = sor.u32 %s55, %s56
      %p58 = scmp.eq.s32.totalorder %s57, 0
      %s60 = sadd.s32 %s59, 1
      %s61 = scalar_select %p58, %s59, %s60
      %p64 = pneg %p58
      %p65 = scmp.eq.s32.totalorder %s28, 1
      %p66 = por %p64, %p65
      %p67 = scmp.ne.s32.totalorder %s59, %s62
      %p68 = scmp.eq.s32.totalorder %s28, 0
      %p69 = por %p67, %p68
      %p70 = scmp.ne.s32.totalorder %s59, %s62
      %p71 = scmp.eq.s32.totalorder %s33, 1
      %p72 = por %p70, %p71
      %p73 = scmp.ne.s32.totalorder %s62, %s63
      %p74 = scmp.eq.s32.totalorder %s33, 0
      %p75 = por %p73, %p74
      %p76 = scmp.ne.s32.totalorder %s62, %s63
      %p77 = scmp.eq.s32.totalorder %s34, 1
      %p78 = por %p76, %p77
      %p80 = scmp.ne.s32.totalorder %s63, %s79
      %p81 = scmp.eq.s32.totalorder %s34, 0
      %p82 = por %p80, %p81
      %s83 = ssub.s32 %s35, %s54
      %p84 = scmp.eq.s32.totalorder %s83, 0
      %s86 = sadd.s32 %s85, 1
      %s87 = scalar_select %p84, %s85, %s86
      %p90 = pneg %p84
      %p91 = scmp.eq.s32.totalorder %s28, 1
      %p92 = por %p90, %p91
      %p93 = scmp.ne.s32.totalorder %s85, %s88
      %p94 = scmp.eq.s32.totalorder %s28, 0
      %p95 = por %p93, %p94
      %p96 = scmp.ne.s32.totalorder %s85, %s88
      %p97 = scmp.eq.s32.totalorder %s33, 1
      %p98 = por %p96, %p97
      %p99 = scmp.ne.s32.totalorder %s88, %s89
      %p100 = scmp.eq.s32.totalorder %s33, 0
      %p101 = por %p99, %p100
      %p102 = scmp.ne.s32.totalorder %s88, %s89
      %p103 = scmp.eq.s32.totalorder %s34, 1
      %p104 = por %p102, %p103
      %p106 = scmp.ne.s32.totalorder %s89, %s105
      %p107 = scmp.eq.s32.totalorder %s34, 0
      %p108 = por %p106, %p107
      %s109 = ssub.s32 %s35, %s54
      %p110 = scmp.eq.s32.totalorder %s109, 0
      %s112 = sadd.s32 %s111, 1
      %s113 = scalar_select %p110, %s111, %s112
      %p116 = pneg %p110
      %p117 = scmp.eq.s32.totalorder %s28, 1
      %p118 = por %p116, %p117
      %p119 = scmp.ne.s32.totalorder %s111, %s114
      %p120 = scmp.eq.s32.totalorder %s28, 0
      %p121 = por %p119, %p120
      %p122 = scmp.ne.s32.totalorder %s111, %s114
      %p123 = scmp.eq.s32.totalorder %s33, 1
      %p124 = por %p122, %p123
      %p125 = scmp.ne.s32.totalorder %s114, %s115
      %p126 = scmp.eq.s32.totalorder %s33, 0
      %p127 = por %p125, %p126
      %p128 = scmp.ne.s32.totalorder %s114, %s115
      %p129 = scmp.eq.s32.totalorder %s34, 1
      %p130 = por %p128, %p129
      %p132 = scmp.ne.s32.totalorder %s115, %s131
      %p133 = scmp.eq.s32.totalorder %s34, 0
      %p134 = por %p132, %p133
      %s136 = sadd.s32 %s135, 1
      %p139 = scmp.eq.s32.totalorder %s28, 1
      %p140 = scmp.ne.s32.totalorder %s135, %s137
      %p141 = scmp.eq.s32.totalorder %s28, 0
      %p142 = por %p140, %p141
      %p143 = scmp.ne.s32.totalorder %s135, %s137
      %p144 = scmp.eq.s32.totalorder %s33, 1
      %p145 = por %p143, %p144
      %p146 = scmp.ne.s32.totalorder %s137, %s138
      %p147 = scmp.eq.s32.totalorder %s33, 0
      %p148 = por %p146, %p147
      %p149 = scmp.ne.s32.totalorder %s137, %s138
      %p150 = scmp.eq.s32.totalorder %s34, 1
      %p151 = por %p149, %p150
      %p153 = scmp.ne.s32.totalorder %s138, %s152
      %p154 = scmp.eq.s32.totalorder %s34, 0
      %p155 = por %p153, %p154
      %s157 = sadd.s32 %s156, 1
      %p160 = scmp.eq.s32.totalorder %s28, 1
      %p161 = scmp.ne.s32.totalorder %s156, %s158
      %p162 = scmp.eq.s32.totalorder %s28, 0
      %p163 = por %p161, %p162
      %p164 = scmp.ne.s32.totalorder %s156, %s158
      %p165 = scmp.eq.s32.totalorder %s33, 1
      %p166 = por %p164, %p165
      %p167 = scmp.ne.s32.totalorder %s158, %s159
      %p168 = scmp.eq.s32.totalorder %s33, 0
      %p169 = por %p167, %p168
      %p170 = scmp.ne.s32.totalorder %s158, %s159
      %p171 = scmp.eq.s32.totalorder %s34, 1
      %p172 = por %p170, %p171
      %p174 = scmp.ne.s32.totalorder %s159, %s173
      %p175 = scmp.eq.s32.totalorder %s34, 0
      %p176 = por %p174, %p175
      %s178 = sadd.s32 %s177, 1
      %p181 = scmp.eq.s32.totalorder %s28, 1
      %p182 = scmp.ne.s32.totalorder %s177, %s179
      %p183 = scmp.eq.s32.totalorder %s28, 0
      %p184 = por %p182, %p183
      %p185 = scmp.ne.s32.totalorder %s177, %s179
      %p186 = scmp.eq.s32.totalorder %s33, 1
      %p187 = por %p185, %p186
      %p188 = scmp.ne.s32.totalorder %s179, %s180
      %p189 = scmp.eq.s32.totalorder %s33, 0
      %p190 = por %p188, %p189
      %p191 = scmp.ne.s32.totalorder %s179, %s180
      %p192 = scmp.eq.s32.totalorder %s34, 1
      %p193 = por %p191, %p192
      %p195 = scmp.ne.s32.totalorder %s180, %s194
      %p196 = scmp.eq.s32.totalorder %s34, 0
      %p197 = por %p195, %p196
      %s199 = sadd.s32 %s198, 1
      %p202 = scmp.eq.s32.totalorder %s28, 1
      %p203 = scmp.ne.s32.totalorder %s198, %s200
      %p204 = scmp.eq.s32.totalorder %s28, 0
      %p205 = por %p203, %p204
      %p206 = scmp.ne.s32.totalorder %s198, %s200
      %p207 = scmp.eq.s32.totalorder %s33, 1
      %p208 = por %p206, %p207
      %p209 = scmp.ne.s32.totalorder %s200, %s201
      %p210 = scmp.eq.s32.totalorder %s33, 0
      %p211 = por %p209, %p210
      %p212 = scmp.ne.s32.totalorder %s200, %s201
      %p213 = scmp.eq.s32.totalorder %s34, 1
      %p214 = por %p212, %p213
      %p216 = scmp.ne.s32.totalorder %s201, %s215
      %p217 = scmp.eq.s32.totalorder %s34, 0
      %p218 = por %p216, %p217
      %s220 = sadd.s32 %s219, 1
      %p223 = scmp.eq.s32.totalorder %s28, 1
      %p224 = scmp.ne.s32.totalorder %s219, %s221
      %p225 = scmp.eq.s32.totalorder %s28, 0
      %p226 = por %p224, %p225
      %p227 = scmp.ne.s32.totalorder %s219, %s221
      %p228 = scmp.eq.s32.totalorder %s33, 1
      %p229 = por %p227, %p228
      %p230 = scmp.ne.s32.totalorder %s221, %s222
      %p231 = scmp.eq.s32.totalorder %s33, 0
      %p232 = por %p230, %p231
      %p233 = scmp.ne.s32.totalorder %s221, %s222
      %p234 = scmp.eq.s32.totalorder %s34, 1
      %p235 = por %p233, %p234
      %p237 = scmp.ne.s32.totalorder %s222, %s236
      %p238 = scmp.eq.s32.totalorder %s34, 0
      %p239 = por %p237, %p238
      %s241 = sadd.s32 %s240, 1
      %p244 = scmp.eq.s32.totalorder %s28, 1
      %p245 = scmp.ne.s32.totalorder %s240, %s242
      %p246 = scmp.eq.s32.totalorder %s28, 0
      %p247 = por %p245, %p246
      %p248 = scmp.ne.s32.totalorder %s240, %s242
      %p249 = scmp.eq.s32.totalorder %s33, 1
      %p250 = por %p248, %p249
      %p251 = scmp.ne.s32.totalorder %s242, %s243
      %p252 = scmp.eq.s32.totalorder %s33, 0
      %p253 = por %p251, %p252
      %p254 = scmp.ne.s32.totalorder %s242, %s243
      %p255 = scmp.eq.s32.totalorder %s34, 1
      %p256 = por %p254, %p255
      %p258 = scmp.ne.s32.totalorder %s243, %s257
      %p259 = scmp.eq.s32.totalorder %s34, 0
      %p260 = por %p258, %p259
      %s262 = sadd.s32 %s261, 1
      %p265 = scmp.eq.s32.totalorder %s28, 1
      %p266 = scmp.ne.s32.totalorder %s261, %s263
      %p267 = scmp.eq.s32.totalorder %s28, 0
      %p268 = por %p266, %p267
      %p269 = scmp.ne.s32.totalorder %s261, %s263
      %p270 = scmp.eq.s32.totalorder %s33, 1
      %p271 = por %p269, %p270
      %p272 = scmp.ne.s32.totalorder %s263, %s264
      %p273 = scmp.eq.s32.totalorder %s33, 0
      %p274 = por %p272, %p273
      %p275 = scmp.ne.s32.totalorder %s263, %s264
      %p276 = scmp.eq.s32.totalorder %s34, 1
      %p277 = por %p275, %p276
      %p279 = scmp.ne.s32.totalorder %s264, %s278
      %p280 = scmp.eq.s32.totalorder %s34, 0
      %p281 = por %p279, %p280
      %s283 = sadd.s32 %s282, 1
      %p286 = scmp.eq.s32.totalorder %s28, 1
      %p287 = scmp.ne.s32.totalorder %s282, %s284
      %p288 = scmp.eq.s32.totalorder %s28, 0
      %p289 = por %p287, %p288
      %p290 = scmp.ne.s32.totalorder %s282, %s284
      %p291 = scmp.eq.s32.totalorder %s33, 1
      %p292 = por %p290, %p291
      %p293 = scmp.ne.s32.totalorder %s284, %s285
      %p294 = scmp.eq.s32.totalorder %s33, 0
      %p295 = por %p293, %p294
      %p296 = scmp.ne.s32.totalorder %s284, %s285
      %p297 = scmp.eq.s32.totalorder %s34, 1
      %p298 = por %p296, %p297
      %p300 = scmp.ne.s32.totalorder %s285, %s299
      %p301 = scmp.eq.s32.totalorder %s34, 0
      %p302 = por %p300, %p301
      %s303 = ssub.s32 %s35, %s54
      %s304 = ssub.s32 %s36, %s50
      %s305 = sor.u32 %s303, %s304
      %p306 = scmp.eq.s32.totalorder %s305, 0
      %s308 = sadd.s32 %s307, 1
      %s309 = scalar_select %p306, %s307, %s308
      %p312 = pneg %p306
      %p313 = scmp.eq.s32.totalorder %s28, 1
      %p314 = por %p312, %p313
      %p315 = scmp.ne.s32.totalorder %s307, %s310
      %p316 = scmp.eq.s32.totalorder %s28, 0
      %p317 = por %p315, %p316
      %p318 = scmp.ne.s32.totalorder %s307, %s310
      %p319 = scmp.eq.s32.totalorder %s33, 1
      %p320 = por %p318, %p319
      %p321 = scmp.ne.s32.totalorder %s310, %s311
      %p322 = scmp.eq.s32.totalorder %s33, 0
      %p323 = por %p321, %p322
      %p324 = scmp.ne.s32.totalorder %s310, %s311
      %p325 = scmp.eq.s32.totalorder %s34, 1
      %p326 = por %p324, %p325
      %p328 = scmp.ne.s32.totalorder %s311, %s327
      %p329 = scmp.eq.s32.totalorder %s34, 0
      %p330 = por %p328, %p329
      %p331 = scmp.le.s32.totalorder 1, %s28
      %p332 = scmp.lt.s32.totalorder %s28, 3
      %p333 = pnand %p331, %p332
      %p334 = pneg %p333
      // Predicated region
      $region9: #{tpu_custom_call.1} parent=5 // pred_check
        _
      $region10: #{tpu_custom_call.1} parent=5 // pred_check_branch
        %336 = sbr.rel (%p333) target = $region12
      $region11: #{tpu_custom_call.1} parent=5 // pred_region
        %s337 = ssub.s32 %s28, 1
        // Predicated region
        $region13: #{tpu_custom_call.1} parent=11 // pred_check
          %p338 = pneg %p148
        $region14: #{tpu_custom_call.1} parent=11 // pred_check_branch
          %340 = sbr.rel (%p338) target = $region16
        $region15: #{tpu_custom_call.1} parent=11 // pred_region
          %s342 = ssub.s32 256, 256
          %343 = vsyncadd [#allocation6], %s342
          %s344 = sshll.u32 [#allocation7], 4
          %s345 = int_to_ptr.vmem [resolvable:$true] %s344
          %350 = dma.hbm_to_vmem [thread:$0]  %s3, 256, %s345, [#allocation6], 64, 64, 4
        $region16: #{tpu_custom_call.1} parent=11 // pred_fallthru
          _
        // Predicated region
        $region17: #{tpu_custom_call.1} parent=11 // pred_check
          %p351 = pneg %p169
        $region18: #{tpu_custom_call.1} parent=11 // pred_check_branch
          %353 = sbr.rel (%p351) target = $region20
        $region19: #{tpu_custom_call.1} parent=11 // pred_region
          %s355 = ssub.s32 256, 256
          %356 = vsyncadd [#allocation9], %s355
          %s357 = sshll.u32 [#allocation8], 4
          %s358 = int_to_ptr.vmem [resolvable:$true] %s357
          %363 = dma.hbm_to_vmem [thread:$0]  %s4, 256, %s358, [#allocation9], 64, 64, 4
        $region20: #{tpu_custom_call.1} parent=11 // pred_fallthru
          _
        // Predicated region
        $region21: #{tpu_custom_call.1} parent=11 // pred_check
          %p364 = pneg %p190
        $region22: #{tpu_custom_call.1} parent=11 // pred_check_branch
          %366 = sbr.rel (%p364) target = $region24
        $region23: #{tpu_custom_call.1} parent=11 // pred_region
          _
        $region24: #{tpu_custom_call.1} parent=11 // pred_fallthru
          _
        // Predicated region
        $region25: #{tpu_custom_call.1} parent=11 // pred_check
          %p367 = pneg %p211
        $region26: #{tpu_custom_call.1} parent=11 // pred_check_branch
          %369 = sbr.rel (%p367) target = $region28
        $region27: #{tpu_custom_call.1} parent=11 // pred_region
          %s371 = ssub.s32 16, 16
          %372 = vsyncadd [#allocation9], %s371
          %s374 = sshll.u32 [#allocation10], 4
          %s375 = int_to_ptr.vmem [resolvable:$true] %s374
          %377 = dma.hbm_to_vmem [thread:$0]  %s6, 16, %s375, [#allocation9]
        $region28: #{tpu_custom_call.1} parent=11 // pred_fallthru
          _
        // Predicated region
        $region29: #{tpu_custom_call.1} parent=11 // pred_check
          %p378 = pneg %p232
        $region30: #{tpu_custom_call.1} parent=11 // pred_check_branch
          %380 = sbr.rel (%p378) target = $region32
        $region31: #{tpu_custom_call.1} parent=11 // pred_region
          %s382 = ssub.s32 16, 16
          %383 = vsyncadd [#allocation12], %s382
          %s385 = sshll.u32 [#allocation11], 4
          %s386 = int_to_ptr.vmem [resolvable:$true] %s385
          %388 = dma.hbm_to_vmem [thread:$0]  %s7, 16, %s386, [#allocation12]
        $region32: #{tpu_custom_call.1} parent=11 // pred_fallthru
          _
        // Predicated region
        $region33: #{tpu_custom_call.1} parent=11 // pred_check
          %p389 = pneg %p253
        $region34: #{tpu_custom_call.1} parent=11 // pred_check_branch
          %391 = sbr.rel (%p389) target = $region36
        $region35: #{tpu_custom_call.1} parent=11 // pred_region
          %s393 = ssub.s32 16, 16
          %394 = vsyncadd [#allocation12], %s393
          %s396 = sshll.u32 [#allocation13], 4
          %s397 = int_to_ptr.vmem [resolvable:$true] %s396
          %399 = dma.hbm_to_vmem [thread:$0]  %s8, 16, %s397, [#allocation12]
        $region36: #{tpu_custom_call.1} parent=11 // pred_fallthru
          _
        // Predicated region
        $region37: #{tpu_custom_call.1} parent=11 // pred_check
          %p400 = pneg %p274
        $region38: #{tpu_custom_call.1} parent=11 // pred_check_branch
          %402 = sbr.rel (%p400) target = $region40
        $region39: #{tpu_custom_call.1} parent=11 // pred_region
          _
        $region40: #{tpu_custom_call.1} parent=11 // pred_fallthru
          _
        // Predicated region
        $region41: #{tpu_custom_call.1} parent=11 // pred_check
          %p403 = pneg %p295
        $region42: #{tpu_custom_call.1} parent=11 // pred_check_branch
          %405 = sbr.rel (%p403) target = $region44
        $region43: #{tpu_custom_call.1} parent=11 // pred_region
          _
        $region44: #{tpu_custom_call.1} parent=11 // pred_fallthru
          _
      $region12: #{tpu_custom_call.1} parent=5 // pred_fallthru
        _
      %p406 = scmp.lt.s32.totalorder %s28, 2
      // Predicated region
      $region45: #{tpu_custom_call.1} parent=5 // pred_check
        %p407 = pneg %p406
      $region46: #{tpu_custom_call.1} parent=5 // pred_check_branch
        %409 = sbr.rel (%p407) target = $region48
      $region47: #{tpu_custom_call.1} parent=5 // pred_region
        // Predicated region
        $region49: #{tpu_custom_call.1} parent=47 // pred_check
          %p410 = pneg %p69
        $region50: #{tpu_custom_call.1} parent=47 // pred_check_branch
          %412 = sbr.rel (%p410) target = $region52
        $region51: #{tpu_custom_call.1} parent=47 // pred_region
          %s413 = sand.u32 %s59, 1
          %s414 = scalar_lea.sflag [#allocation3], %s413
          %s415 = sand.u32 %s59, 1
          %s416 = smul.addr %s415, 4
          %s417 = scalar_lea.vmem [#allocation2], %s416
          %s419 = ssub.s32 64, 64
          %420 = vsyncadd %s414, %s419
          %s421 = sadd.s32 %s36, %s35
          %s422 = smul.addr %s421, 64
          %s423 = scalar_lea.hbm %s0, %s422
          %s425 = sshll.u32 %s417, 4
          %s426 = int_to_ptr.vmem [resolvable:$true] %s425
          %428 = dma.hbm_to_vmem [thread:$0]  %s423, 64, %s426, %s414
        $region52: #{tpu_custom_call.1} parent=47 // pred_fallthru
          _
        // Predicated region
        $region53: #{tpu_custom_call.1} parent=47 // pred_check
          %p429 = pneg %p95
        $region54: #{tpu_custom_call.1} parent=47 // pred_check_branch
          %431 = sbr.rel (%p429) target = $region56
        $region55: #{tpu_custom_call.1} parent=47 // pred_region
          %s432 = sand.u32 %s28, 1
          %s433 = scalar_lea.sflag [#allocation6], %s432
          %s434 = sand.u32 %s85, 1
          %s435 = smul.addr %s434, 4
          %s436 = scalar_lea.vmem [#allocation5], %s435
          %s438 = ssub.s32 64, 64
          %439 = vsyncadd %s433, %s438
          %s440 = smul.addr %s35, 64
          %s441 = scalar_lea.hbm %s1, %s440
          %s443 = sshll.u32 %s436, 4
          %s444 = int_to_ptr.vmem [resolvable:$true] %s443
          %446 = dma.hbm_to_vmem [thread:$0]  %s441, 64, %s444, %s433
        $region56: #{tpu_custom_call.1} parent=47 // pred_fallthru
          _
        // Predicated region
        $region57: #{tpu_custom_call.1} parent=47 // pred_check
          %p447 = pneg %p121
        $region58: #{tpu_custom_call.1} parent=47 // pred_check_branch
          %449 = sbr.rel (%p447) target = $region60
        $region59: #{tpu_custom_call.1} parent=47 // pred_region
          %p450 = scmp.lt.s32.totalorder %s35, 1
          %s451 = scalar_select %p450, %s35, 1
          %s452 = scalar_lea.vmem %s2, %s451
        $region60: #{tpu_custom_call.1} parent=47 // pred_fallthru
          _
      $region48: #{tpu_custom_call.1} parent=5 // pred_fallthru
        _
      %p453 = scmp.le.s32.totalorder 1, %s28
      %p454 = scmp.lt.s32.totalorder %s28, 3
      %p455 = pnand %p453, %p454
      %p456 = pneg %p455
      // Predicated region
      $region61: #{tpu_custom_call.1} parent=5 // pred_check
        _
      $region62: #{tpu_custom_call.1} parent=5 // pred_check_branch
        %458 = sbr.rel (%p455) target = $region64
      $region63: #{tpu_custom_call.1} parent=5 // pred_region
        %s459 = ssub.s32 %s28, 1
        %s460 = sand.u32 %s62, 1
        %s461 = scalar_lea.sflag [#allocation3], %s460
        %s462 = sand.u32 %s62, 1
        %s463 = smul.addr %s462, 4
        %s464 = scalar_lea.vmem [#allocation2], %s463
        // Predicated region
        $region65: #{tpu_custom_call.1} parent=63 // pred_check
          %p465 = pneg %p75
        $region66: #{tpu_custom_call.1} parent=63 // pred_check_branch
          %467 = sbr.rel (%p465) target = $region68
        $region67: #{tpu_custom_call.1} parent=63 // pred_region
          %468 = dma.done %s461, 64
        $region68: #{tpu_custom_call.1} parent=63 // pred_fallthru
          _
        %s469 = sand.u32 %s33, 1
        %s470 = scalar_lea.sflag [#allocation6], %s469
        %s471 = sand.u32 %s88, 1
        %s472 = smul.addr %s471, 4
        %s473 = scalar_lea.vmem [#allocation5], %s472
        // Predicated region
        $region69: #{tpu_custom_call.1} parent=63 // pred_check
          %p474 = pneg %p101
        $region70: #{tpu_custom_call.1} parent=63 // pred_check_branch
          %476 = sbr.rel (%p474) target = $region72
        $region71: #{tpu_custom_call.1} parent=63 // pred_region
          %477 = dma.done %s470, 64
        $region72: #{tpu_custom_call.1} parent=63 // pred_fallthru
          _
        // Predicated region
        $region73: #{tpu_custom_call.1} parent=63 // pred_check
          %p478 = pneg %p148
        $region74: #{tpu_custom_call.1} parent=63 // pred_check_branch
          %480 = sbr.rel (%p478) target = $region76
        $region75: #{tpu_custom_call.1} parent=63 // pred_region
          %481 = dma.done [#allocation6], 256
        $region76: #{tpu_custom_call.1} parent=63 // pred_fallthru
          _
        // Predicated region
        $region77: #{tpu_custom_call.1} parent=63 // pred_check
          %p482 = pneg %p169
        $region78: #{tpu_custom_call.1} parent=63 // pred_check_branch
          %484 = sbr.rel (%p482) target = $region80
        $region79: #{tpu_custom_call.1} parent=63 // pred_region
          %485 = dma.done [#allocation9], 256
        $region80: #{tpu_custom_call.1} parent=63 // pred_fallthru
          _
        // Predicated region
        $region81: #{tpu_custom_call.1} parent=63 // pred_check
          %p486 = pneg %p211
        $region82: #{tpu_custom_call.1} parent=63 // pred_check_branch
          %488 = sbr.rel (%p486) target = $region84
        $region83: #{tpu_custom_call.1} parent=63 // pred_region
          %489 = dma.done [#allocation9], 16
        $region84: #{tpu_custom_call.1} parent=63 // pred_fallthru
          _
        // Predicated region
        $region85: #{tpu_custom_call.1} parent=63 // pred_check
          %p490 = pneg %p232
        $region86: #{tpu_custom_call.1} parent=63 // pred_check_branch
          %492 = sbr.rel (%p490) target = $region88
        $region87: #{tpu_custom_call.1} parent=63 // pred_region
          %493 = dma.done [#allocation12], 16
        $region88: #{tpu_custom_call.1} parent=63 // pred_fallthru
          _
        // Predicated region
        $region89: #{tpu_custom_call.1} parent=63 // pred_check
          %p494 = pneg %p253
        $region90: #{tpu_custom_call.1} parent=63 // pred_check_branch
          %496 = sbr.rel (%p494) target = $region92
        $region91: #{tpu_custom_call.1} parent=63 // pred_region
          %497 = dma.done [#allocation12], 16
        $region92: #{tpu_custom_call.1} parent=63 // pred_fallthru
          _
        %s498 = sand.u32 %s62, 1
        %s499 = scalar_lea.sflag [#allocation3], %s498
        %s500 = sand.u32 %s62, 1
        %s501 = smul.addr %s500, 4
        %s502 = scalar_lea.vmem [#allocation2], %s501
        %p503 = pneg %p75
        %p504 = pneg %p72
        %s505 = sand.u32 %s33, 1
        %s506 = scalar_lea.sflag [#allocation6], %s505
        %s507 = sand.u32 %s88, 1
        %s508 = smul.addr %s507, 4
        %s509 = scalar_lea.vmem [#allocation5], %s508
        %p510 = pneg %p101
        %p511 = pneg %p98
        %p512 = scmp.lt.s32.totalorder %s38, 1
        %s513 = scalar_select %p512, %s38, 1
        %s514 = scalar_lea.vmem %s2, %s513
        %p515 = pneg %p127
        %p516 = pneg %p124
        %p517 = pneg %p148
        %p518 = pneg %p145
        %p519 = pneg %p169
        %p520 = pneg %p166
        %p521 = pneg %p190
        %p522 = pneg %p187
        %p523 = pneg %p211
        %p524 = pneg %p208
        %p525 = pneg %p232
        %p526 = pneg %p229
        %p527 = pneg %p253
        %p528 = pneg %p250
        %p529 = pneg %p274
        %p530 = pneg %p271
        %p531 = pneg %p295
        %p532 = pneg %p292
        %p533 = pneg %p323
        %p534 = pneg %p320
        %s535 = sand.u32 %s310, 1
        %s536 = scalar_lea.sflag [#allocation4], %s535
        %s537 = sand.u32 %s310, 1
        %s538 = smul.addr %s537, 8
        %s539 = scalar_lea.vmem [#allocation14], %s538
        %p540 = scmp.lt.s32.totalorder %s38, 1
        %s541 = scalar_select %p540, %s38, 1
        %s542 = scalar_lea.vmem %s2, %s541
        %s544 = smul.u32 %s40, 4
        %s545 = smul.addr %s544, 4
        %s546 = scalar_lea.vmem [#allocation7], %s545
        %v547 = vld [vmem:[%s546] sm:$0xf]
        %v548 = vld [vmem:[%s546 + $0x4] sm:$0xf]
        %v549 = vld [vmem:[%s546 + $0x8] sm:$0xf]
        %v550 = vld [vmem:[%s546 + $0xc] sm:$0xf]
        %s551 = smul.addr %s544, 4
        %s552 = scalar_lea.vmem [#allocation8], %s551
        %v553 = vld [vmem:[%s552] sm:$0xf]
        %v554 = vld [vmem:[%s552 + $0x4] sm:$0xf]
        %v555 = vld [vmem:[%s552 + $0x8] sm:$0xf]
        %v556 = vld [vmem:[%s552 + $0xc] sm:$0xf]
        %s557 = smul.addr %s544, 4
        %s558 = scalar_lea.vmem %s5, %s557
        %v559 = vld [vmem:[%s558] sm:$0xf]
        %v560 = vld [vmem:[%s558 + $0x4] sm:$0xf]
        %v561 = vld [vmem:[%s558 + $0x8] sm:$0xf]
        %v562 = vld [vmem:[%s558 + $0xc] sm:$0xf]
        %s563 = scalar_lea.vmem [#allocation10], %s40
        %v564 = vld [vmem:[%s563] sm:$0x1]
        %s565 = scalar_lea.vmem [#allocation11], %s40
        %v566 = vld [vmem:[%s565] sm:$0x1]
        %s567 = scalar_lea.vmem [#allocation13], %s40
        %v568 = vld [vmem:[%s567] sm:$0x1]
        %s569 = smul.addr %s544, 4
        %s570 = scalar_lea.vmem %s9, %s569
        %v571 = vld [vmem:[%s570] sm:$0xf]
        %v572 = vld [vmem:[%s570 + $0x4] sm:$0xf]
        %v573 = vld [vmem:[%s570 + $0x8] sm:$0xf]
        %v574 = vld [vmem:[%s570 + $0xc] sm:$0xf]
        %v575 = vld [vmem:[%s464] sm:$0xf]
        %v577 = vlaneseq
        %v578 = vshrl.u32 %v577, 7
        %v579 = vsub.s32 0, %v578
        %v580 = vrot.slane %v564, %v579
        %v586 = vunpack.c.l.b16 %v547
        %v587 = vunpack.c.l.b16 %v548
        %v588 = vunpack.c.l.b16 %v549
        %v589 = vunpack.c.l.b16 %v550
        %v590 = vpack.c.b16 %v587, %v586
        %v591 = vpack.c.b16 %v589, %v588
        %vm594 = vcmask 261120
        %v596 = vsel %vm594, %v575, 0
        %598 = vmatprep.subr.bf16.mxu0 0
        %599 = vmatpush1.bf16.msra.mxu0 %v590
        %600 = vmatprep.subr.bf16.mxu0 0
        %601 = vmatpush1.bf16.msra.mxu0 %v591
        %602 = vmatprep.subr.bf16.mxu0 0
        %603 = vmatpush1.bf16.msra.mxu0 0
        %604 = vmatprep.subr.bf16.mxu0 0
        %605 = vmatpush1.bf16.msra.mxu0 0
        %606 = vmatprep.subr.bf16.mxu0 0
        %607 = vmatpush1.bf16.msra.mxu0 0
        %608 = vmatprep.subr.bf16.mxu0 0
        %609 = vmatpush1.bf16.msra.mxu0 0
        %610 = vmatprep.subr.bf16.mxu0 0
        %611 = vmatpush1.bf16.msra.mxu0 0
        %612 = vmatprep.subr.bf16.mxu0 0
        %613 = vmatpush1.bf16.msra.mxu0 0
        %614 = vmatprep.subr.bf16.mxu0 0
        %615 = vmatpush1.bf16.msra.mxu0 0
        %616 = vmatprep.subr.bf16.mxu0 0
        %617 = vmatpush1.bf16.msra.mxu0 0
        %618 = vmatprep.subr.bf16.mxu0 0
        %619 = vmatpush1.bf16.msra.mxu0 0
        %620 = vmatprep.subr.bf16.mxu0 0
        %621 = vmatpush1.bf16.msra.mxu0 0
        %622 = vmatprep.subr.bf16.mxu0 0
        %623 = vmatpush1.bf16.msra.mxu0 0
        %624 = vmatprep.subr.bf16.mxu0 0
        %625 = vmatpush1.bf16.msra.mxu0 0
        %626 = vmatprep.subr.bf16.mxu0 0
        %627 = vmatpush1.bf16.msra.mxu0 0
        %628 = vmatprep.subr.bf16.mxu0 0
        %629 = vmatpush1.bf16.msra.mxu0 0
        %630 = vmatprep.mubr.bf16.mxu0 0
        %631 = vmatmul.mubr.bf16.gmra.mrb[0].mxu0 %v596
        %v632 = vpop.f32.mrb[0].mxu0
        %v633 = vadd.f32 %v580, %v632
        %v634 = vpop.f32.mrb[0].mxu0
        %v635 = vpop.f32.mrb[0].mxu0
        %v636 = vpop.f32.mrb[0].mxu0
        %637 = vdwg.mxu0
        %v638 = vpack.c.bf16 %v633, %v633
        %v639 = vld [vmem:[%s473] sm:$0xf]
        %v641 = vlaneseq
        %v642 = vshrl.u32 %v641, 7
        %v643 = vsub.s32 0, %v642
        %v644 = vrot.slane %v566, %v643
        %v650 = vunpack.c.l.b16 %v553
        %v651 = vunpack.c.l.b16 %v554
        %v652 = vunpack.c.l.b16 %v555
        %v653 = vunpack.c.l.b16 %v556
        %v654 = vpack.c.b16 %v651, %v650
        %v655 = vpack.c.b16 %v653, %v652
        %v659 = vsel %vm594, %v639, 0
        %661 = vmatprep.subr.bf16.mxu0 0
        %662 = vmatpush1.bf16.msra.mxu0 %v654
        %663 = vmatprep.subr.bf16.mxu0 0
        %664 = vmatpush1.bf16.msra.mxu0 %v655
        %665 = vmatprep.subr.bf16.mxu0 0
        %666 = vmatpush1.bf16.msra.mxu0 0
        %667 = vmatprep.subr.bf16.mxu0 0
        %668 = vmatpush1.bf16.msra.mxu0 0
        %669 = vmatprep.subr.bf16.mxu0 0
        %670 = vmatpush1.bf16.msra.mxu0 0
        %671 = vmatprep.subr.bf16.mxu0 0
        %672 = vmatpush1.bf16.msra.mxu0 0
        %673 = vmatprep.subr.bf16.mxu0 0
        %674 = vmatpush1.bf16.msra.mxu0 0
        %675 = vmatprep.subr.bf16.mxu0 0
        %676 = vmatpush1.bf16.msra.mxu0 0
        %677 = vmatprep.subr.bf16.mxu0 0
        %678 = vmatpush1.bf16.msra.mxu0 0
        %679 = vmatprep.subr.bf16.mxu0 0
        %680 = vmatpush1.bf16.msra.mxu0 0
        %681 = vmatprep.subr.bf16.mxu0 0
        %682 = vmatpush1.bf16.msra.mxu0 0
        %683 = vmatprep.subr.bf16.mxu0 0
        %684 = vmatpush1.bf16.msra.mxu0 0
        %685 = vmatprep.subr.bf16.mxu0 0
        %686 = vmatpush1.bf16.msra.mxu0 0
        %687 = vmatprep.subr.bf16.mxu0 0
        %688 = vmatpush1.bf16.msra.mxu0 0
        %689 = vmatprep.subr.bf16.mxu0 0
        %690 = vmatpush1.bf16.msra.mxu0 0
        %691 = vmatprep.subr.bf16.mxu0 0
        %692 = vmatpush1.bf16.msra.mxu0 0
        %693 = vmatprep.mubr.bf16.mxu0 0
        %694 = vmatmul.mubr.bf16.gmra.mrb[0].mxu0 %v659
        %v695 = vpop.f32.mrb[0].mxu0
        %v696 = vadd.f32 %v644, %v695
        %v697 = vpop.f32.mrb[0].mxu0
        %v698 = vpop.f32.mrb[0].mxu0
        %v699 = vpop.f32.mrb[0].mxu0
        %700 = vdwg.mxu0
        %v702 = vlaneseq
        %v703 = vshrl.u32 %v702, 7
        %v704 = vsub.s32 0, %v703
        %v705 = vrot.slane %v568, %v704
        %v711 = vunpack.c.l.b16 %v559
        %v712 = vunpack.c.l.b16 %v560
        %v713 = vunpack.c.l.b16 %v561
        %v714 = vunpack.c.l.b16 %v562
        %v715 = vpack.c.b16 %v712, %v711
        %v716 = vpack.c.b16 %v714, %v713
        %719 = vmatprep.subr.bf16.mxu0 0
        %720 = vmatpush1.bf16.msra.mxu0 %v715
        %721 = vmatprep.subr.bf16.mxu0 0
        %722 = vmatpush1.bf16.msra.mxu0 %v716
        %723 = vmatprep.subr.bf16.mxu0 0
        %724 = vmatpush1.bf16.msra.mxu0 0
        %725 = vmatprep.subr.bf16.mxu0 0
        %726 = vmatpush1.bf16.msra.mxu0 0
        %727 = vmatprep.subr.bf16.mxu0 0
        %728 = vmatpush1.bf16.msra.mxu0 0
        %729 = vmatprep.subr.bf16.mxu0 0
        %730 = vmatpush1.bf16.msra.mxu0 0
        %731 = vmatprep.subr.bf16.mxu0 0
        %732 = vmatpush1.bf16.msra.mxu0 0
        %733 = vmatprep.subr.bf16.mxu0 0
        %734 = vmatpush1.bf16.msra.mxu0 0
        %735 = vmatprep.subr.bf16.mxu0 0
        %736 = vmatpush1.bf16.msra.mxu0 0
        %737 = vmatprep.subr.bf16.mxu0 0
        %738 = vmatpush1.bf16.msra.mxu0 0
        %739 = vmatprep.subr.bf16.mxu0 0
        %740 = vmatpush1.bf16.msra.mxu0 0
        %741 = vmatprep.subr.bf16.mxu0 0
        %742 = vmatpush1.bf16.msra.mxu0 0
        %743 = vmatprep.subr.bf16.mxu0 0
        %744 = vmatpush1.bf16.msra.mxu0 0
        %745 = vmatprep.subr.bf16.mxu0 0
        %746 = vmatpush1.bf16.msra.mxu0 0
        %747 = vmatprep.subr.bf16.mxu0 0
        %748 = vmatpush1.bf16.msra.mxu0 0
        %749 = vmatprep.subr.bf16.mxu0 0
        %750 = vmatpush1.bf16.msra.mxu0 0
        %751 = vmatprep.mubr.bf16.mxu0 0
        %752 = vmatmul.mubr.bf16.gmra.mrb[0].mxu0 %v659
        %v753 = vpop.f32.mrb[0].mxu0
        %v754 = vadd.f32 %v705, %v753
        %v755 = vpop.f32.mrb[0].mxu0
        %v756 = vpop.f32.mrb[0].mxu0
        %v757 = vpop.f32.mrb[0].mxu0
        %758 = vdwg.mxu0
        %v759 = vpack.c.bf16 %v696, %v696
        %v760 = vpack.c.bf16 %v754, %v754
        %v761 = vld [vmem:[%s542] sm:$0x1]
        %v763 = vlaneseq
        %v764 = vshrl.u32 %v763, 7
        %v765 = vsub.s32 0, %v764
        %v766 = vrot.slane %v761, %v765
        %vm768 = vcmask 64512
        %v770 = vsel %vm768, %v638, 0
        %v773 = vsel %vm768, %v759, 0
        %775 = vmatprep.subr.bf16.mxu0 0
        %776 = vmatpush1.bf16.xpose.msra.mxu0 %v773
        %777 = vmatprep.subr.bf16.mxu0 0
        %778 = vmatpush1.bf16.xpose.msra.mxu0 0
        %779 = vmatprep.subr.bf16.mxu0 0
        %780 = vmatpush1.bf16.xpose.msra.mxu0 0
        %781 = vmatprep.subr.bf16.mxu0 0
        %782 = vmatpush1.bf16.xpose.msra.mxu0 0
        %783 = vmatprep.subr.bf16.mxu0 0
        %784 = vmatpush1.bf16.xpose.msra.mxu0 0
        %785 = vmatprep.subr.bf16.mxu0 0
        %786 = vmatpush1.bf16.xpose.msra.mxu0 0
        %787 = vmatprep.subr.bf16.mxu0 0
        %788 = vmatpush1.bf16.xpose.msra.mxu0 0
        %789 = vmatprep.subr.bf16.mxu0 0
        %790 = vmatpush1.bf16.xpose.msra.mxu0 0
        %791 = vmatprep.subr.bf16.mxu0 0
        %792 = vmatpush1.bf16.xpose.msra.mxu0 0
        %793 = vmatprep.subr.bf16.mxu0 0
        %794 = vmatpush1.bf16.xpose.msra.mxu0 0
        %795 = vmatprep.subr.bf16.mxu0 0
        %796 = vmatpush1.bf16.xpose.msra.mxu0 0
        %797 = vmatprep.subr.bf16.mxu0 0
        %798 = vmatpush1.bf16.xpose.msra.mxu0 0
        %799 = vmatprep.subr.bf16.mxu0 0
        %800 = vmatpush1.bf16.xpose.msra.mxu0 0
        %801 = vmatprep.subr.bf16.mxu0 0
        %802 = vmatpush1.bf16.xpose.msra.mxu0 0
        %803 = vmatprep.subr.bf16.mxu0 0
        %804 = vmatpush1.bf16.xpose.msra.mxu0 0
        %805 = vmatprep.subr.bf16.mxu0 0
        %806 = vmatpush1.bf16.xpose.msra.mxu0 0
        %807 = vmatprep.mubr.bf16.mxu0 0
        %808 = vmatmul.mubr.bf16.gmra.mrb[0].mxu0 %v770
        %v809 = vpop.f32.mrb[0].mxu0
        %v810 = vadd.f32 %v766, %v809
        %v811 = vpop.f32.mrb[0].mxu0
        %v812 = vpop.f32.mrb[0].mxu0
        %v813 = vpop.f32.mrb[0].mxu0
        %814 = vdwg.mxu0
        %v815 = vsel %vm768, %v810, -inf
        %816 = vmax.xlane.f32.xlu0 %v815
        %v817 = vpop.xlane.xlu0 %816
        %v818 = vsub.f32 %v810, %v817
        %v819 = vmul.f32 %v818, 1.442695
        %v820 = vpow.pop %v819
        %v821 = vsel %vm768, %v820, 0.0
        %822 = vadd.xlane.f32.xlu0 %v821
        %v823 = vpop.xlane.xlu0 %822
        %v824 = vrcp.pop %v823
        %v825 = vmul.f32 %v820, %v824
        %v826 = vpack.c.bf16 %v825, %v825
        %v828 = vsel %vm768, %v826, 0
        %vm830 = vcmask 1043456
        %v832 = vsel %vm830, %v760, 0
        %834 = vmatprep.subr.bf16.mxu0 0
        %835 = vmatpush1.bf16.msra.mxu0 %v832
        %836 = vmatprep.subr.bf16.mxu0 0
        %837 = vmatpush1.bf16.msra.mxu0 0
        %838 = vmatprep.subr.bf16.mxu0 0
        %839 = vmatpush1.bf16.msra.mxu0 0
        %840 = vmatprep.subr.bf16.mxu0 0
        %841 = vmatpush1.bf16.msra.mxu0 0
        %842 = vmatprep.subr.bf16.mxu0 0
        %843 = vmatpush1.bf16.msra.mxu0 0
        %844 = vmatprep.subr.bf16.mxu0 0
        %845 = vmatpush1.bf16.msra.mxu0 0
        %846 = vmatprep.subr.bf16.mxu0 0
        %847 = vmatpush1.bf16.msra.mxu0 0
        %848 = vmatprep.subr.bf16.mxu0 0
        %849 = vmatpush1.bf16.msra.mxu0 0
        %850 = vmatprep.subr.bf16.mxu0 0
        %851 = vmatpush1.bf16.msra.mxu0 0
        %852 = vmatprep.subr.bf16.mxu0 0
        %853 = vmatpush1.bf16.msra.mxu0 0
        %854 = vmatprep.subr.bf16.mxu0 0
        %855 = vmatpush1.bf16.msra.mxu0 0
        %856 = vmatprep.subr.bf16.mxu0 0
        %857 = vmatpush1.bf16.msra.mxu0 0
        %858 = vmatprep.subr.bf16.mxu0 0
        %859 = vmatpush1.bf16.msra.mxu0 0
        %860 = vmatprep.subr.bf16.mxu0 0
        %861 = vmatpush1.bf16.msra.mxu0 0
        %862 = vmatprep.subr.bf16.mxu0 0
        %863 = vmatpush1.bf16.msra.mxu0 0
        %864 = vmatprep.subr.bf16.mxu0 0
        %865 = vmatpush1.bf16.msra.mxu0 0
        %866 = vmatprep.mubr.bf16.mxu0 0
        %867 = vmatmul.mubr.bf16.gmra.mrb[0].mxu0 %v828
        %v868 = vpop.f32.mrb[0].mxu0
        %v869 = vadd.f32 0.0, %v868
        %v870 = vpop.f32.mrb[0].mxu0
        %v871 = vpop.f32.mrb[0].mxu0
        %v872 = vpop.f32.mrb[0].mxu0
        %873 = vdwg.mxu0
        %875 = vrot.lane.b32.xlu0 %v638, 120
        %v876 = vpop.permute.xlu0 %875
        %878 = vrot.lane.b32.xlu0 %v759, 120
        %v879 = vpop.permute.xlu0 %878
        %v881 = vsel %vm768, %v876, 0
        %v884 = vsel %vm768, %v879, 0
        %886 = vmatprep.subr.bf16.mxu0 0
        %887 = vmatpush1.bf16.xpose.msra.mxu0 %v884
        %888 = vmatprep.subr.bf16.mxu0 0
        %889 = vmatpush1.bf16.xpose.msra.mxu0 0
        %890 = vmatprep.subr.bf16.mxu0 0
        %891 = vmatpush1.bf16.xpose.msra.mxu0 0
        %892 = vmatprep.subr.bf16.mxu0 0
        %893 = vmatpush1.bf16.xpose.msra.mxu0 0
        %894 = vmatprep.subr.bf16.mxu0 0
        %895 = vmatpush1.bf16.xpose.msra.mxu0 0
        %896 = vmatprep.subr.bf16.mxu0 0
        %897 = vmatpush1.bf16.xpose.msra.mxu0 0
        %898 = vmatprep.subr.bf16.mxu0 0
        %899 = vmatpush1.bf16.xpose.msra.mxu0 0
        %900 = vmatprep.subr.bf16.mxu0 0
        %901 = vmatpush1.bf16.xpose.msra.mxu0 0
        %902 = vmatprep.subr.bf16.mxu0 0
        %903 = vmatpush1.bf16.xpose.msra.mxu0 0
        %904 = vmatprep.subr.bf16.mxu0 0
        %905 = vmatpush1.bf16.xpose.msra.mxu0 0
        %906 = vmatprep.subr.bf16.mxu0 0
        %907 = vmatpush1.bf16.xpose.msra.mxu0 0
        %908 = vmatprep.subr.bf16.mxu0 0
        %909 = vmatpush1.bf16.xpose.msra.mxu0 0
        %910 = vmatprep.subr.bf16.mxu0 0
        %911 = vmatpush1.bf16.xpose.msra.mxu0 0
        %912 = vmatprep.subr.bf16.mxu0 0
        %913 = vmatpush1.bf16.xpose.msra.mxu0 0
        %914 = vmatprep.subr.bf16.mxu0 0
        %915 = vmatpush1.bf16.xpose.msra.mxu0 0
        %916 = vmatprep.subr.bf16.mxu0 0
        %917 = vmatpush1.bf16.xpose.msra.mxu0 0
        %918 = vmatprep.mubr.bf16.mxu0 0
        %919 = vmatmul.mubr.bf16.gmra.mrb[0].mxu0 %v881
        %v920 = vpop.f32.mrb[0].mxu0
        %v921 = vadd.f32 %v766, %v920
        %v922 = vpop.f32.mrb[0].mxu0
        %v923 = vpop.f32.mrb[0].mxu0
        %v924 = vpop.f32.mrb[0].mxu0
        %925 = vdwg.mxu0
        %v926 = vsel %vm768, %v921, -inf
        %927 = vmax.xlane.f32.xlu0 %v926
        %v928 = vpop.xlane.xlu0 %927
        %v929 = vsub.f32 %v921, %v928
        %v930 = vmul.f32 %v929, 1.442695
        %v931 = vpow.pop %v930
        %v932 = vsel %vm768, %v931, 0.0
        %933 = vadd.xlane.f32.xlu0 %v932
        %v934 = vpop.xlane.xlu0 %933
        %v935 = vrcp.pop %v934
        %v936 = vmul.f32 %v931, %v935
        %v937 = vpack.c.bf16 %v936, %v936
        %939 = vrot.lane.b32.xlu0 %v760, 120
        %v940 = vpop.permute.xlu0 %939
        %v942 = vsel %vm768, %v937, 0
        %v945 = vsel %vm830, %v940, 0
        %947 = vmatprep.subr.bf16.mxu0 0
        %948 = vmatpush1.bf16.msra.mxu0 %v945
        %949 = vmatprep.subr.bf16.mxu0 0
        %950 = vmatpush1.bf16.msra.mxu0 0
        %951 = vmatprep.subr.bf16.mxu0 0
        %952 = vmatpush1.bf16.msra.mxu0 0
        %953 = vmatprep.subr.bf16.mxu0 0
        %954 = vmatpush1.bf16.msra.mxu0 0
        %955 = vmatprep.subr.bf16.mxu0 0
        %956 = vmatpush1.bf16.msra.mxu0 0
        %957 = vmatprep.subr.bf16.mxu0 0
        %958 = vmatpush1.bf16.msra.mxu0 0
        %959 = vmatprep.subr.bf16.mxu0 0
        %960 = vmatpush1.bf16.msra.mxu0 0
        %961 = vmatprep.subr.bf16.mxu0 0
        %962 = vmatpush1.bf16.msra.mxu0 0
        %963 = vmatprep.subr.bf16.mxu0 0
        %964 = vmatpush1.bf16.msra.mxu0 0
        %965 = vmatprep.subr.bf16.mxu0 0
        %966 = vmatpush1.bf16.msra.mxu0 0
        %967 = vmatprep.subr.bf16.mxu0 0
        %968 = vmatpush1.bf16.msra.mxu0 0
        %969 = vmatprep.subr.bf16.mxu0 0
        %970 = vmatpush1.bf16.msra.mxu0 0
        %971 = vmatprep.subr.bf16.mxu0 0
        %972 = vmatpush1.bf16.msra.mxu0 0
        %973 = vmatprep.subr.bf16.mxu0 0
        %974 = vmatpush1.bf16.msra.mxu0 0
        %975 = vmatprep.subr.bf16.mxu0 0
        %976 = vmatpush1.bf16.msra.mxu0 0
        %977 = vmatprep.subr.bf16.mxu0 0
        %978 = vmatpush1.bf16.msra.mxu0 0
        %979 = vmatprep.mubr.bf16.mxu0 0
        %980 = vmatmul.mubr.bf16.gmra.mrb[0].mxu0 %v942
        %v981 = vpop.f32.mrb[0].mxu0
        %v982 = vadd.f32 0.0, %v981
        %v983 = vpop.f32.mrb[0].mxu0
        %v984 = vpop.f32.mrb[0].mxu0
        %v985 = vpop.f32.mrb[0].mxu0
        %986 = vdwg.mxu0
        %987 = vrot.lane.b32.xlu0 %v638, 112
        %v988 = vpop.permute.xlu0 %987
        %989 = vrot.lane.b32.xlu0 %v759, 112
        %v990 = vpop.permute.xlu0 %989
        %v992 = vsel %vm768, %v988, 0
        %v995 = vsel %vm768, %v990, 0
        %997 = vmatprep.subr.bf16.mxu0 0
        %998 = vmatpush1.bf16.xpose.msra.mxu0 %v995
        %999 = vmatprep.subr.bf16.mxu0 0
        %1000 = vmatpush1.bf16.xpose.msra.mxu0 0
        %1001 = vmatprep.subr.bf16.mxu0 0
        %1002 = vmatpush1.bf16.xpose.msra.mxu0 0
        %1003 = vmatprep.subr.bf16.mxu0 0
        %1004 = vmatpush1.bf16.xpose.msra.mxu0 0
        %1005 = vmatprep.subr.bf16.mxu0 0
        %1006 = vmatpush1.bf16.xpose.msra.mxu0 0
        %1007 = vmatprep.subr.bf16.mxu0 0
        %1008 = vmatpush1.bf16.xpose.msra.mxu0 0
        %1009 = vmatprep.subr.bf16.mxu0 0
        %1010 = vmatpush1.bf16.xpose.msra.mxu0 0
        %1011 = vmatprep.subr.bf16.mxu0 0
        %1012 = vmatpush1.bf16.xpose.msra.mxu0 0
        %1013 = vmatprep.subr.bf16.mxu0 0
        %1014 = vmatpush1.bf16.xpose.msra.mxu0 0
        %1015 = vmatprep.subr.bf16.mxu0 0
        %1016 = vmatpush1.bf16.xpose.msra.mxu0 0
        %1017 = vmatprep.subr.bf16.mxu0 0
        %1018 = vmatpush1.bf16.xpose.msra.mxu0 0
        %1019 = vmatprep.subr.bf16.mxu0 0
        %1020 = vmatpush1.bf16.xpose.msra.mxu0 0
        %1021 = vmatprep.subr.bf16.mxu0 0
        %1022 = vmatpush1.bf16.xpose.msra.mxu0 0
        %1023 = vmatprep.subr.bf16.mxu0 0
        %1024 = vmatpush1.bf16.xpose.msra.mxu0 0
        %1025 = vmatprep.subr.bf16.mxu0 0
        %1026 = vmatpush1.bf16.xpose.msra.mxu0 0
        %1027 = vmatprep.subr.bf16.mxu0 0
        %1028 = vmatpush1.bf16.xpose.msra.mxu0 0
        %1029 = vmatprep.mubr.bf16.mxu0 0
        %1030 = vmatmul.mubr.bf16.gmra.mrb[0].mxu0 %v992
        %v1031 = vpop.f32.mrb[0].mxu0
        %v1032 = vadd.f32 %v766, %v1031
        %v1033 = vpop.f32.mrb[0].mxu0
        %v1034 = vpop.f32.mrb[0].mxu0
        %v1035 = vpop.f32.mrb[0].mxu0
        %1036 = vdwg.mxu0
        %v1037 = vsel %vm768, %v1032, -inf
        %1038 = vmax.xlane.f32.xlu0 %v1037
        %v1039 = vpop.xlane.xlu0 %1038
        %v1040 = vsub.f32 %v1032, %v1039
        %v1041 = vmul.f32 %v1040, 1.442695
        %v1042 = vpow.pop %v1041
        %v1043 = vsel %vm768, %v1042, 0.0
        %1044 = vadd.xlane.f32.xlu0 %v1043
        %v1045 = vpop.xlane.xlu0 %1044
        %v1046 = vrcp.pop %v1045
        %v1047 = vmul.f32 %v1042, %v1046
        %v1048 = vpack.c.bf16 %v1047, %v1047
        %1049 = vrot.lane.b32.xlu0 %v760, 112
        %v1050 = vpop.permute.xlu0 %1049
        %v1052 = vsel %vm768, %v1048, 0
        %v1055 = vsel %vm830, %v1050, 0
        %1057 = vmatprep.subr.bf16.mxu0 0
        %1058 = vmatpush1.bf16.msra.mxu0 %v1055
        %1059 = vmatprep.subr.bf16.mxu0 0
        %1060 = vmatpush1.bf16.msra.mxu0 0
        %1061 = vmatprep.subr.bf16.mxu0 0
        %1062 = vmatpush1.bf16.msra.mxu0 0
        %1063 = vmatprep.subr.bf16.mxu0 0
        %1064 = vmatpush1.bf16.msra.mxu0 0
        %1065 = vmatprep.subr.bf16.mxu0 0
        %1066 = vmatpush1.bf16.msra.mxu0 0
        %1067 = vmatprep.subr.bf16.mxu0 0
        %1068 = vmatpush1.bf16.msra.mxu0 0
        %1069 = vmatprep.subr.bf16.mxu0 0
        %1070 = vmatpush1.bf16.msra.mxu0 0
        %1071 = vmatprep.subr.bf16.mxu0 0
        %1072 = vmatpush1.bf16.msra.mxu0 0
        %1073 = vmatprep.subr.bf16.mxu0 0
        %1074 = vmatpush1.bf16.msra.mxu0 0
        %1075 = vmatprep.subr.bf16.mxu0 0
        %1076 = vmatpush1.bf16.msra.mxu0 0
        %1077 = vmatprep.subr.bf16.mxu0 0
        %1078 = vmatpush1.bf16.msra.mxu0 0
        %1079 = vmatprep.subr.bf16.mxu0 0
        %1080 = vmatpush1.bf16.msra.mxu0 0
        %1081 = vmatprep.subr.bf16.mxu0 0
        %1082 = vmatpush1.bf16.msra.mxu0 0
        %1083 = vmatprep.subr.bf16.mxu0 0
        %1084 = vmatpush1.bf16.msra.mxu0 0
        %1085 = vmatprep.subr.bf16.mxu0 0
        %1086 = vmatpush1.bf16.msra.mxu0 0
        %1087 = vmatprep.subr.bf16.mxu0 0
        %1088 = vmatpush1.bf16.msra.mxu0 0
        %1089 = vmatprep.mubr.bf16.mxu0 0
        %1090 = vmatmul.mubr.bf16.gmra.mrb[0].mxu0 %v1052
        %v1091 = vpop.f32.mrb[0].mxu0
        %v1092 = vadd.f32 0.0, %v1091
        %v1093 = vpop.f32.mrb[0].mxu0
        %v1094 = vpop.f32.mrb[0].mxu0
        %v1095 = vpop.f32.mrb[0].mxu0
        %1096 = vdwg.mxu0
        %1097 = vrot.lane.b32.xlu0 %v638, 104
        %v1098 = vpop.permute.xlu0 %1097
        %1099 = vrot.lane.b32.xlu0 %v759, 104
        %v1100 = vpop.permute.xlu0 %1099
        %v1102 = vsel %vm768, %v1098, 0
        %v1105 = vsel %vm768, %v1100, 0
        %1107 = vmatprep.subr.bf16.mxu0 0
        %1108 = vmatpush1.bf16.xpose.msra.mxu0 %v1105
        %1109 = vmatprep.subr.bf16.mxu0 0
        %1110 = vmatpush1.bf16.xpose.msra.mxu0 0
        %1111 = vmatprep.subr.bf16.mxu0 0
        %1112 = vmatpush1.bf16.xpose.msra.mxu0 0
        %1113 = vmatprep.subr.bf16.mxu0 0
        %1114 = vmatpush1.bf16.xpose.msra.mxu0 0
        %1115 = vmatprep.subr.bf16.mxu0 0
        %1116 = vmatpush1.bf16.xpose.msra.mxu0 0
        %1117 = vmatprep.subr.bf16.mxu0 0
        %1118 = vmatpush1.bf16.xpose.msra.mxu0 0
        %1119 = vmatprep.subr.bf16.mxu0 0
        %1120 = vmatpush1.bf16.xpose.msra.mxu0 0
        %1121 = vmatprep.subr.bf16.mxu0 0
        %1122 = vmatpush1.bf16.xpose.msra.mxu0 0
        %1123 = vmatprep.subr.bf16.mxu0 0
        %1124 = vmatpush1.bf16.xpose.msra.mxu0 0
        %1125 = vmatprep.subr.bf16.mxu0 0
        %1126 = vmatpush1.bf16.xpose.msra.mxu0 0
        %1127 = vmatprep.subr.bf16.mxu0 0
        %1128 = vmatpush1.bf16.xpose.msra.mxu0 0
        %1129 = vmatprep.subr.bf16.mxu0 0
        %1130 = vmatpush1.bf16.xpose.msra.mxu0 0
        %1131 = vmatprep.subr.bf16.mxu0 0
        %1132 = vmatpush1.bf16.xpose.msra.mxu0 0
        %1133 = vmatprep.subr.bf16.mxu0 0
        %1134 = vmatpush1.bf16.xpose.msra.mxu0 0
        %1135 = vmatprep.subr.bf16.mxu0 0
        %1136 = vmatpush1.bf16.xpose.msra.mxu0 0
        %1137 = vmatprep.subr.bf16.mxu0 0
        %1138 = vmatpush1.bf16.xpose.msra.mxu0 0
        %1139 = vmatprep.mubr.bf16.mxu0 0
        %1140 = vmatmul.mubr.bf16.gmra.mrb[0].mxu0 %v1102
        %v1141 = vpop.f32.mrb[0].mxu0
        %v1142 = vadd.f32 %v766, %v1141
        %v1143 = vpop.f32.mrb[0].mxu0
        %v1144 = vpop.f32.mrb[0].mxu0
        %v1145 = vpop.f32.mrb[0].mxu0
        %1146 = vdwg.mxu0
        %v1147 = vsel %vm768, %v1142, -inf
        %1148 = vmax.xlane.f32.xlu0 %v1147
        %v1149 = vpop.xlane.xlu0 %1148
        %v1150 = vsub.f32 %v1142, %v1149
        %v1151 = vmul.f32 %v1150, 1.442695
        %v1152 = vpow.pop %v1151
        %v1153 = vsel %vm768, %v1152, 0.0
        %1154 = vadd.xlane.f32.xlu0 %v1153
        %v1155 = vpop.xlane.xlu0 %1154
        %v1156 = vrcp.pop %v1155
        %v1157 = vmul.f32 %v1152, %v1156
        %v1158 = vpack.c.bf16 %v1157, %v1157
        %1159 = vrot.lane.b32.xlu0 %v760, 104
        %v1160 = vpop.permute.xlu0 %1159
        %v1162 = vsel %vm768, %v1158, 0
        %v1165 = vsel %vm830, %v1160, 0
        %1167 = vmatprep.subr.bf16.mxu0 0
        %1168 = vmatpush1.bf16.msra.mxu0 %v1165
        %1169 = vmatprep.subr.bf16.mxu0 0
        %1170 = vmatpush1.bf16.msra.mxu0 0
        %1171 = vmatprep.subr.bf16.mxu0 0
        %1172 = vmatpush1.bf16.msra.mxu0 0
        %1173 = vmatprep.subr.bf16.mxu0 0
        %1174 = vmatpush1.bf16.msra.mxu0 0
        %1175 = vmatprep.subr.bf16.mxu0 0
        %1176 = vmatpush1.bf16.msra.mxu0 0
        %1177 = vmatprep.subr.bf16.mxu0 0
        %1178 = vmatpush1.bf16.msra.mxu0 0
        %1179 = vmatprep.subr.bf16.mxu0 0
        %1180 = vmatpush1.bf16.msra.mxu0 0
        %1181 = vmatprep.subr.bf16.mxu0 0
        %1182 = vmatpush1.bf16.msra.mxu0 0
        %1183 = vmatprep.subr.bf16.mxu0 0
        %1184 = vmatpush1.bf16.msra.mxu0 0
        %1185 = vmatprep.subr.bf16.mxu0 0
        %1186 = vmatpush1.bf16.msra.mxu0 0
        %1187 = vmatprep.subr.bf16.mxu0 0
        %1188 = vmatpush1.bf16.msra.mxu0 0
        %1189 = vmatprep.subr.bf16.mxu0 0
        %1190 = vmatpush1.bf16.msra.mxu0 0
        %1191 = vmatprep.subr.bf16.mxu0 0
        %1192 = vmatpush1.bf16.msra.mxu0 0
        %1193 = vmatprep.subr.bf16.mxu0 0
        %1194 = vmatpush1.bf16.msra.mxu0 0
        %1195 = vmatprep.subr.bf16.mxu0 0
        %1196 = vmatpush1.bf16.msra.mxu0 0
        %1197 = vmatprep.subr.bf16.mxu0 0
        %1198 = vmatpush1.bf16.msra.mxu0 0
        %1199 = vmatprep.mubr.bf16.mxu0 0
        %1200 = vmatmul.mubr.bf16.gmra.mrb[0].mxu0 %v1162
        %v1201 = vpop.f32.mrb[0].mxu0
        %v1202 = vadd.f32 0.0, %v1201
        %v1203 = vpop.f32.mrb[0].mxu0
        %v1204 = vpop.f32.mrb[0].mxu0
        %v1205 = vpop.f32.mrb[0].mxu0
        %1206 = vdwg.mxu0
        %1208 = vrot.lane.b32.xlu0 %v982, 8
        %v1209 = vpop.permute.xlu0 %1208
        %1212 = vrot.lane.b32.xlu0 %v1092, 16
        %v1213 = vpop.permute.xlu0 %1212
        %1216 = vrot.lane.b32.xlu0 %v1202, 24
        %v1217 = vpop.permute.xlu0 %1216
        %v1219 = vsel %vm768, %v869, %v1209
        %vm1220 = vcmask 130048
        %v1221 = vsel %vm1220, %v1219, %v1213
        %vm1222 = vcmask 195584
        %v1223 = vsel %vm1222, %v1221, %v1217
        %v1224 = vpack.c.bf16 %v1223, %v1223
        %v1225 = vld [vmem:[%s10] sm:$0x1]
        %v1227 = vlaneseq
        %v1228 = vshrl.u32 %v1227, 7
        %v1229 = vsub.s32 0, %v1228
        %v1230 = vrot.slane %v1225, %v1229
        %v1236 = vunpack.c.l.b16 %v571
        %v1237 = vunpack.c.l.b16 %v572
        %v1238 = vunpack.c.l.b16 %v573
        %v1239 = vunpack.c.l.b16 %v574
        %v1240 = vpack.c.b16 %v1237, %v1236
        %v1241 = vpack.c.b16 %v1239, %v1238
        %v1245 = vsel %vm594, %v1224, 0
        %1247 = vmatprep.subr.bf16.mxu0 0
        %1248 = vmatpush1.bf16.msra.mxu0 %v1240
        %1249 = vmatprep.subr.bf16.mxu0 0
        %1250 = vmatpush1.bf16.msra.mxu0 %v1241
        %1251 = vmatprep.subr.bf16.mxu0 0
        %1252 = vmatpush1.bf16.msra.mxu0 0
        %1253 = vmatprep.subr.bf16.mxu0 0
        %1254 = vmatpush1.bf16.msra.mxu0 0
        %1255 = vmatprep.subr.bf16.mxu0 0
        %1256 = vmatpush1.bf16.msra.mxu0 0
        %1257 = vmatprep.subr.bf16.mxu0 0
        %1258 = vmatpush1.bf16.msra.mxu0 0
        %1259 = vmatprep.subr.bf16.mxu0 0
        %1260 = vmatpush1.bf16.msra.mxu0 0
        %1261 = vmatprep.subr.bf16.mxu0 0
        %1262 = vmatpush1.bf16.msra.mxu0 0
        %1263 = vmatprep.subr.bf16.mxu0 0
        %1264 = vmatpush1.bf16.msra.mxu0 0
        %1265 = vmatprep.subr.bf16.mxu0 0
        %1266 = vmatpush1.bf16.msra.mxu0 0
        %1267 = vmatprep.subr.bf16.mxu0 0
        %1268 = vmatpush1.bf16.msra.mxu0 0
        %1269 = vmatprep.subr.bf16.mxu0 0
        %1270 = vmatpush1.bf16.msra.mxu0 0
        %1271 = vmatprep.subr.bf16.mxu0 0
        %1272 = vmatpush1.bf16.msra.mxu0 0
        %1273 = vmatprep.subr.bf16.mxu0 0
        %1274 = vmatpush1.bf16.msra.mxu0 0
        %1275 = vmatprep.subr.bf16.mxu0 0
        %1276 = vmatpush1.bf16.msra.mxu0 0
        %1277 = vmatprep.subr.bf16.mxu0 0
        %1278 = vmatpush1.bf16.msra.mxu0 0
        %1279 = vmatprep.mubr.bf16.mxu0 0
        %1280 = vmatmul.mubr.bf16.gmra.mrb[0].mxu0 %v1245
        %v1281 = vpop.f32.mrb[0].mxu0
        %v1282 = vadd.f32 %v1230, %v1281
        %v1283 = vpop.f32.mrb[0].mxu0
        %v1284 = vpop.f32.mrb[0].mxu0
        %v1285 = vpop.f32.mrb[0].mxu0
        %1286 = vdwg.mxu0
        %1287 = vst.msk [vmem:[%s539] sm:$0xff] %vm594, %v1282
        %s1288 = sand.u32 %s310, 1
        %s1289 = scalar_lea.sflag [#allocation4], %s1288
        %s1290 = sand.u32 %s310, 1
        %s1291 = smul.addr %s1290, 8
        %s1292 = scalar_lea.vmem [#allocation14], %s1291
        // Predicated region
        $region93: #{tpu_custom_call.1} parent=63 // pred_check
          %p1293 = pneg %p320
        $region94: #{tpu_custom_call.1} parent=63 // pred_check_branch
          %1295 = sbr.rel (%p1293) target = $region96
        $region95: #{tpu_custom_call.1} parent=63 // pred_region
          %s1297 = ssub.s32 128, 128
          %1298 = vsyncadd %s1289, %s1297
          %s1299 = sadd.s32 %s39, %s38
          %s1300 = smul.addr %s1299, 128
          %s1301 = scalar_lea.hbm %s11, %s1300
          %s1303 = sshll.u32 %s1292, 4
          %s1304 = int_to_ptr.vmem [resolvable:$true] %s1303
          %1306 = dma.vmem_to_hbm [thread:$0]  %s1304, 128, %s1301, %s1289
        $region96: #{tpu_custom_call.1} parent=63 // pred_fallthru
          _
      $region64: #{tpu_custom_call.1} parent=5 // pred_fallthru
        _
      %p1307 = scmp.le.s32.totalorder 2, %s28
      // Predicated region
      $region97: #{tpu_custom_call.1} parent=5 // pred_check
        %p1308 = pneg %p1307
      $region98: #{tpu_custom_call.1} parent=5 // pred_check_branch
        %1310 = sbr.rel (%p1308) target = $region100
      $region99: #{tpu_custom_call.1} parent=5 // pred_region
        %s1311 = ssub.s32 %s28, 2
        // Predicated region
        $region101: #{tpu_custom_call.1} parent=99 // pred_check
          %p1312 = pneg %p326
        $region102: #{tpu_custom_call.1} parent=99 // pred_check_branch
          %1314 = sbr.rel (%p1312) target = $region104
        $region103: #{tpu_custom_call.1} parent=99 // pred_region
          %s1315 = sand.u32 %s311, 1
          %s1316 = scalar_lea.sflag [#allocation4], %s1315
          %s1317 = sand.u32 %s311, 1
          %s1318 = smul.addr %s1317, 8
          %s1319 = scalar_lea.vmem [#allocation14], %s1318
          %1320 = dma.done %s1316, 128
        $region104: #{tpu_custom_call.1} parent=99 // pred_fallthru
          _
      $region100: #{tpu_custom_call.1} parent=5 // pred_fallthru
        _
    $region6: #{tpu_custom_call.1} parent=1 // loop_footer
      %s32 = sadd.s32 1, %s28
    $region7: #{tpu_custom_call.1} parent=1 // loop_footer_branch
      %27 = sbr.rel target = $region3
    $region8: #{tpu_custom_call.1} parent=1 // loop_exit
      _
    %1321 = vsyncpa [#allocation3], 1
    %s1322 = scalar_lea.sflag [#allocation3], 1
    %1323 = vsyncpa %s1322, 1
    %1324 = vsyncpa [#allocation6], 1
    %s1325 = scalar_lea.sflag [#allocation6], 1
    %1326 = vsyncpa %s1325, 1
    %1327 = vsyncpa [#allocation9], 1
    %1328 = vsyncpa [#allocation12], 1
    %1329 = vsyncpa [#allocation4], 1
    %s1330 = scalar_lea.sflag [#allocation4], 1
    %1331 = vsyncpa %s1330, 1

</llo_original>
